<compile_context>
chip_gen: v7x
topology: tpu7x:2x2x1
jax: 0.10.0
libtpu: 0.0.40
codegen_flags: <defaults>
</compile_context>

<pallas_src>
import jax
import jax.numpy as jnp
from jax.experimental import pallas as pl
from jax.experimental.pallas import tpu as pltpu

EPS = 1e-5
NUM_COUT_TILES = 2          # 2 balanced tiles -> 1 per TensorCore on v7x
LANE = 128                  # Cout tile must stay a multiple of 128 (lane-dense)


def conv_bn_kernel(x_ref, w_ref, gamma_ref, beta_ref, o_ref):
    # x_ref:     [M, Cin]   bf16, full flattened input (resident every step)
    # w_ref:     [Cin, TC]  bf16, one Cout tile of the 1x1 conv weight
    # gamma_ref: [1, TC]    f32 BN scale tile
    # beta_ref:  [1, TC]    f32 BN shift tile
    # o_ref:     [M, TC]    f32 output tile
    #
    # 1x1 conv == matmul on the MXU (bf16 inputs, f32 accumulation).
    y = jnp.dot(x_ref[...], w_ref[...], preferred_element_type=jnp.float32)

    # Fused BatchNorm (training mode, biased variance like PyTorch's forward).
    # Two-pass (mean, then centered variance) to avoid catastrophic
    # cancellation of E[y^2] - E[y]^2 on real activations.
    inv_m = 1.0 / y.shape[0]
    mean = jnp.sum(y, axis=0, keepdims=True) * inv_m
    d = y - mean
    var = jnp.sum(d * d, axis=0, keepdims=True) * inv_m
    scale = jax.lax.rsqrt(var + EPS) * gamma_ref[...]
    o_ref[...] = (d * scale + beta_ref[...]).astype(o_ref.dtype)


def _padded_cout(cout):
    # Round Cout up so it splits into NUM_COUT_TILES lane-dense tiles.
    step = NUM_COUT_TILES * LANE
    return pl.cdiv(cout, step) * step


def prepare_conv_bn_params(weight_oihw, gamma, beta):
    """One-time (static) parameter packing — keep OUT of the per-step hot path.

    weight_oihw: [Cout, Cin, 1, 1] -> bf16 [Cin, Cout_pad]
    gamma/beta:  [Cout]            -> f32  [1, Cout_pad]
    Padded channels use gamma=1 / beta=0 so they produce exact zeros.
    """
    cout, cin = weight_oihw.shape[0], weight_oihw.shape[1]
    cout_pad = _padded_cout(cout)
    pad = cout_pad - cout

    w_mat = jnp.transpose(weight_oihw.reshape(cout, cin), (1, 0)).astype(jnp.bfloat16)
    w_mat = jnp.pad(w_mat, ((0, 0), (0, pad)))
    gamma2d = jnp.pad(gamma.astype(jnp.float32), (0, pad),
                      constant_values=1.0).reshape(1, cout_pad)
    beta2d = jnp.pad(beta.astype(jnp.float32), (0, pad)).reshape(1, cout_pad)
    return w_mat, gamma2d, beta2d


def conv2d_batchnorm_apply(x_nchw, w_mat, gamma2d, beta2d, cout):
    """Hot path: x_nchw [N, Cin, H, W] + pre-packed params -> [N, Cout, H, W]."""
    n, cin, h, w = x_nchw.shape
    m = n * h * w
    cout_pad = w_mat.shape[1]
    tile = cout_pad // NUM_COUT_TILES

    # NCHW -> [M, Cin], cast to bf16 (tiny: ~34 KB).
    x_flat = jnp.transpose(x_nchw, (0, 2, 3, 1)).reshape(m, cin).astype(jnp.bfloat16)

    cost = pl.CostEstimate(
        flops=2 * m * cin * cout_pad,
        bytes_accessed=(m * cin * 2 + cin * cout_pad * 2 + m * cout_pad * 4
                        + 2 * cout_pad * 4),
        transcendentals=cout_pad,
    )

    out_flat = pl.pallas_call(
        conv_bn_kernel,
        out_shape=jax.ShapeDtypeStruct((m, cout_pad), jnp.float32),
        grid=(NUM_COUT_TILES,),
        in_specs=[
            pl.BlockSpec((m, cin), lambda j: (0, 0)),      # x: resident
            pl.BlockSpec((cin, tile), lambda j: (0, j)),   # weight: streamed
            pl.BlockSpec((1, tile), lambda j: (0, j)),     # gamma
            pl.BlockSpec((1, tile), lambda j: (0, j)),     # beta
        ],
        out_specs=pl.BlockSpec((m, tile), lambda j: (0, j)),
        compiler_params=pltpu.CompilerParams(
            dimension_semantics=("parallel",),
        ),
        cost_estimate=cost,
    )(x_flat, w_mat, gamma2d, beta2d)

    # Drop padded channels, then [M, Cout] -> NCHW to match the module output.
    # TODO(synk): if the downstream consumer accepts NHWC / bf16, skip this
    # transpose and emit bf16 from the kernel to halve writeback traffic.
    out_flat = out_flat[:, :cout]
    return jnp.transpose(out_flat.reshape(n, h, w, cout), (0, 3, 1, 2))


def conv2d_batchnorm(x_nchw, weight_oihw, gamma, beta):
    """Convenience wrapper (prep + apply). For real use, call prepare_* once."""
    w_mat, gamma2d, beta2d = prepare_conv_bn_params(weight_oihw, gamma, beta)
    return conv2d_batchnorm_apply(x_nchw, w_mat, gamma2d, beta2d,
                                  weight_oihw.shape[0])


def reference(x_nchw, weight_oihw, gamma, beta):
    # Plain-JAX f32 reference for the same forward pass (conv1x1 + train-mode BN).
    n, cin, h, w = x_nchw.shape
    cout = weight_oihw.shape[0]
    x_flat = jnp.transpose(x_nchw, (0, 2, 3, 1)).reshape(-1, cin)
    y = x_flat @ jnp.transpose(weight_oihw.reshape(cout, cin))
    mean = jnp.mean(y, axis=0, keepdims=True)
    var = jnp.mean((y - mean) ** 2, axis=0, keepdims=True)
    y = (y - mean) * jax.lax.rsqrt(var + EPS) * gamma[None, :] + beta[None, :]
    return jnp.transpose(y.reshape(n, h, w, cout), (0, 3, 1, 2))


if __name__ == "__main__":
    N, CIN, H, W = 1, 344, 7, 7
    COUT = 2064

    key = jax.random.PRNGKey(0)
    kx, kw, kg, kb = jax.random.split(key, 4)

    x = jax.random.normal(kx, (N, CIN, H, W), dtype=jnp.float32)
    # Deterministic parameter init (synthetic, not a checkpoint load).
    conv_w = jax.random.normal(kw, (COUT, CIN, 1, 1), dtype=jnp.float32) * 0.05
    bn_gamma = jnp.ones((COUT,), dtype=jnp.float32) + 0.01 * jax.random.normal(kg, (COUT,))
    bn_beta = 0.01 * jax.random.normal(kb, (COUT,), dtype=jnp.float32)

    # Parameter packing done ONCE, outside the hot path.
    w_mat, gamma2d, beta2d = prepare_conv_bn_params(conv_w, bn_gamma, bn_beta)
    apply_fn = jax.jit(
        lambda xv: conv2d_batchnorm_apply(xv, w_mat, gamma2d, beta2d, COUT))

    out = apply_fn(x)
    out = jax.block_until_ready(out)

    ref = reference(x, conv_w, bn_gamma, bn_beta)
    assert out.shape == (N, COUT, H, W)
    # bf16 inputs to the MXU -> relaxed tolerance vs the f32 reference.
    assert jnp.allclose(out, ref, rtol=5e-2, atol=5e-2), (
        float(jnp.max(jnp.abs(out - ref))))

    print("KERNEL_OK")
</pallas_src>

<mosaic_0001>
module attributes {stable_mosaic.version = 11 : i64} {
  func.func @conv_bn_kernel(%arg0: i32, %arg1: memref<49x344xbf16, #tpu.memory_space<vmem>>, %arg2: memref<344x1152xbf16, #tpu.memory_space<vmem>>, %arg3: memref<1x1152xf32, #tpu.memory_space<vmem>>, %arg4: memref<1x1152xf32, #tpu.memory_space<vmem>>, %arg5: memref<49x1152xf32, #tpu.memory_space<vmem>>) attributes {dimension_semantics = [#tpu.dimension_semantics<parallel>], iteration_bounds = array<i64: 2>, scalar_prefetch = 0 : i64, scratch_operands = 0 : i64, tpu.core_type = #tpu.core_type<tc>, window_params = [{pipeline_mode = #tpu.pipeline_mode<synchronous>, transform_indices = @transform_0, window_bounds = array<i64: 49, 344>}, {transform_indices = @transform_1, window_bounds = array<i64: 344, 1152>}, {transform_indices = @transform_2, window_bounds = array<i64: 1, 1152>}, {transform_indices = @transform_3, window_bounds = array<i64: 1, 1152>}, {transform_indices = @transform_4, window_bounds = array<i64: 49, 1152>}]} {
    %c0 = arith.constant 0 : index
    %c0_0 = arith.constant 0 : index
    %0 = vector.load %arg1[%c0, %c0_0] : memref<49x344xbf16, #tpu.memory_space<vmem>>, vector<49x344xbf16>
    %c0_1 = arith.constant 0 : index
    %c0_2 = arith.constant 0 : index
    %1 = vector.load %arg2[%c0_1, %c0_2] : memref<344x1152xbf16, #tpu.memory_space<vmem>>, vector<344x1152xbf16>
    %cst = arith.constant dense<0.000000e+00> : vector<49x1152xf32>
    %2 = tpu.matmul %0, %1, %cst {dimension_numbers = #tpu.dot_dimension_numbers<[1], [0], [0], [1], [0, 0, 1, 1], [], []>} : vector<49x344xbf16>, vector<344x1152xbf16>, vector<49x1152xf32> -> vector<49x1152xf32>
    %cst_3 = arith.constant dense<0.000000e+00> : vector<1152xf32>
    %3 = vector.multi_reduction <add>, %2, %cst_3 [0] : vector<49x1152xf32> to vector<1152xf32>
    %4 = vector.shape_cast %3 : vector<1152xf32> to vector<1x1152xf32>
    %cst_4 = arith.constant 0.0204081628 : f32
    %5 = vector.broadcast %cst_4 : f32 to vector<1x1152xf32>
    %6 = arith.mulf %4, %5 : vector<1x1152xf32>
    %7 = vector.broadcast %6 : vector<1x1152xf32> to vector<49x1152xf32>
    %8 = arith.subf %2, %7 : vector<49x1152xf32>
    %9 = arith.mulf %8, %8 : vector<49x1152xf32>
    %cst_5 = arith.constant dense<0.000000e+00> : vector<1152xf32>
    %10 = vector.multi_reduction <add>, %9, %cst_5 [0] : vector<49x1152xf32> to vector<1152xf32>
    %11 = vector.shape_cast %10 : vector<1152xf32> to vector<1x1152xf32>
    %cst_6 = arith.constant 0.0204081628 : f32
    %12 = vector.broadcast %cst_6 : f32 to vector<1x1152xf32>
    %13 = arith.mulf %11, %12 : vector<1x1152xf32>
    %cst_7 = arith.constant 9.99999974E-6 : f32
    %14 = vector.broadcast %cst_7 : f32 to vector<1x1152xf32>
    %15 = arith.addf %13, %14 : vector<1x1152xf32>
    %16 = math.rsqrt %15 : vector<1x1152xf32>
    %c0_8 = arith.constant 0 : index
    %c0_9 = arith.constant 0 : index
    %17 = vector.load %arg3[%c0_8, %c0_9] : memref<1x1152xf32, #tpu.memory_space<vmem>>, vector<1x1152xf32>
    %18 = arith.mulf %16, %17 : vector<1x1152xf32>
    %19 = vector.broadcast %18 : vector<1x1152xf32> to vector<49x1152xf32>
    %20 = arith.mulf %8, %19 : vector<49x1152xf32>
    %c0_10 = arith.constant 0 : index
    %c0_11 = arith.constant 0 : index
    %21 = vector.load %arg4[%c0_10, %c0_11] : memref<1x1152xf32, #tpu.memory_space<vmem>>, vector<1x1152xf32>
    %22 = vector.broadcast %21 : vector<1x1152xf32> to vector<49x1152xf32>
    %23 = arith.addf %20, %22 : vector<49x1152xf32>
    %c0_12 = arith.constant 0 : index
    %c0_13 = arith.constant 0 : index
    %24 = vector.load %arg5[%c0_12, %c0_13] : memref<49x1152xf32, #tpu.memory_space<vmem>>, vector<49x1152xf32>
    tpu.vector_store %arg5[%c0_12, %c0_13], %23 {strides = array<i32>} : memref<49x1152xf32, #tpu.memory_space<vmem>>, vector<49x1152xf32>,
    return
  }
  func.func @transform_0(%arg0: i32) -> (i32, i32) {
    %c0_i32 = arith.constant 0 : i32
    %c0_i32_0 = arith.constant 0 : i32
    %c0_i32_1 = arith.constant 0 : i32
    return %c0_i32, %c0_i32_0 : i32, i32
  }
  func.func @transform_1(%arg0: i32) -> (i32, i32) {
    %c0_i32 = arith.constant 0 : i32
    %c0_i32_0 = arith.constant 0 : i32
    return %c0_i32, %arg0 : i32, i32
  }
  func.func @transform_2(%arg0: i32) -> (i32, i32) {
    %c0_i32 = arith.constant 0 : i32
    %c0_i32_0 = arith.constant 0 : i32
    return %c0_i32, %arg0 : i32, i32
  }
  func.func @transform_3(%arg0: i32) -> (i32, i32) {
    %c0_i32 = arith.constant 0 : i32
    %c0_i32_0 = arith.constant 0 : i32
    return %c0_i32, %arg0 : i32, i32
  }
  func.func @transform_4(%arg0: i32) -> (i32, i32) {
    %c0_i32 = arith.constant 0 : i32
    %c0_i32_0 = arith.constant 0 : i32
    return %c0_i32, %arg0 : i32, i32
  }
}

</mosaic_0001>

<llo_original>
// kernel: _lambda_.1
$region0: #{_lambda_.1}
  #allocation0 [shape = 'u32[]', space=smem, size = 0x4, offset = 0x4, fixed_abs, tag = 'smem constant byte address 0x4 - core index']
  #allocation1 [shape = 'u32[144,128]{1,0:T(1,128)}', space=vmem, size = 0x12000, scoped, tag = 'internal scratch']
  %s0 = inlined_call_operand.vmem [shape: bf16[49,344], index: 0, kind: input, shape index: {}]
  %s1 = inlined_call_operand.hbm [shape: bf16[344,2304], index: 1, kind: input, shape index: {}]
  %s2 = inlined_call_operand.hbm [shape: f32[1,2304], index: 2, kind: input, shape index: {}]
  %s3 = inlined_call_operand.hbm [shape: f32[1,2304], index: 3, kind: input, shape index: {}]
  %s4 = inlined_call_operand.vmem [shape: f32[49,2304], index: 4, kind: output, shape index: {}]
  %s5 = sld [smem:[#allocation0]]
  $region80: #{_lambda_.1} parent=0
    _
  %s7 = ssub.s32 1, %s5
  %s8 = scalar_select 0, %s7, %s5
  $region1: #{_lambda_.1} parent=0
    #allocation2 [shape = 'u8[1585152]{0}', space=vmem, size = 0x183000, scoped, tag = 'input window, operand 1']
    #allocation3 [shape = 's32[2]{0}', space=sflag, size = 0x8, scoped, tag = 'scoped memory for _lambda_.1']
    #allocation4 [shape = 'u8[9216]{0}', space=vmem, size = 0x2400, scoped, tag = 'input window, operand 2']
    #allocation5 [shape = 's32[2]{0}', space=sflag, size = 0x8, scoped, tag = 'scoped memory for _lambda_.1']
    #allocation6 [shape = 'u8[9216]{0}', space=vmem, size = 0x2400, scoped, tag = 'input window, operand 3']
    #allocation7 [shape = 'u8[516096]{0}', space=vmem, size = 0x7e000, scoped, tag = 'output window, operand 0']
    %9 = vsyncpa [#allocation3], 0
    %s10 = scalar_lea.sflag [#allocation3], 1
    %11 = vsyncpa %s10, 0
    %12 = vsyncpa [#allocation5], 0
    %s13 = scalar_lea.sflag [#allocation5], 1
    %14 = vsyncpa %s13, 0
    loop: start=0, step=1, limit=4
    $region2: #{_lambda_.1} parent=1 // loop_pre_header
      _
    $region3: #{_lambda_.1} parent=1 // loop_header
      %s16 = sphi 0, %s20
      %p17 = scmp.ge.s32.totalorder %s16, 4
      %s24 = sphi 0, %s24
      %s26 = sphi 0, %s24
      %s27 = sphi 0, %s26
      %s41 = sphi 0, %s27
      %s47 = sphi 0, %s49
      %s50 = sphi 0, %s47
      %s51 = sphi 0, %s50
      %s67 = sphi 0, %s51
      %s73 = sphi 0, %s75
      %s76 = sphi 0, %s73
      %s77 = sphi 0, %s76
      %s93 = sphi 0, %s77
      %s99 = sphi 0, %s101
      %s102 = sphi 0, %s99
      %s103 = sphi 0, %s102
      %s119 = sphi 0, %s103
      %s125 = sphi 0, %s127
      %s128 = sphi 0, %s125
      %s129 = sphi 0, %s128
      %s145 = sphi 0, %s129
    $region4: #{_lambda_.1} parent=1 // loop_header_branch
      %19 = sbr.rel (%p17) target = $region8
    $region5: #{_lambda_.1} parent=1 // loop_body
      %s21 = ssub.s32 %s16, 1
      %s22 = ssub.s32 %s16, 2
      %s23 = sadd.s32 %s16, 1
      %s25 = sadd.s32 %s24, 1
      %p28 = scmp.eq.s32.totalorder %s16, 1
      %p29 = scmp.ne.s32.totalorder %s24, %s26
      %p30 = scmp.eq.s32.totalorder %s16, 0
      %p31 = por %p29, %p30
      %p32 = scmp.ne.s32.totalorder %s24, %s26
      %p33 = scmp.eq.s32.totalorder %s21, 1
      %p34 = por %p32, %p33
      %p35 = scmp.ne.s32.totalorder %s26, %s27
      %p36 = scmp.eq.s32.totalorder %s21, 0
      %p37 = por %p35, %p36
      %p38 = scmp.ne.s32.totalorder %s26, %s27
      %p39 = scmp.eq.s32.totalorder %s22, 1
      %p40 = por %p38, %p39
      %p42 = scmp.ne.s32.totalorder %s27, %s41
      %p43 = scmp.eq.s32.totalorder %s22, 0
      %p44 = por %p42, %p43
      %s45 = ssub.s32 %s16, %s23
      %p46 = scmp.eq.s32.totalorder %s45, 0
      %s48 = sadd.s32 %s47, 1
      %s49 = scalar_select %p46, %s47, %s48
      %p52 = pneg %p46
      %p53 = scmp.eq.s32.totalorder %s16, 1
      %p54 = por %p52, %p53
      %p55 = scmp.ne.s32.totalorder %s47, %s50
      %p56 = scmp.eq.s32.totalorder %s16, 0
      %p57 = por %p55, %p56
      %p58 = scmp.ne.s32.totalorder %s47, %s50
      %p59 = scmp.eq.s32.totalorder %s21, 1
      %p60 = por %p58, %p59
      %p61 = scmp.ne.s32.totalorder %s50, %s51
      %p62 = scmp.eq.s32.totalorder %s21, 0
      %p63 = por %p61, %p62
      %p64 = scmp.ne.s32.totalorder %s50, %s51
      %p65 = scmp.eq.s32.totalorder %s22, 1
      %p66 = por %p64, %p65
      %p68 = scmp.ne.s32.totalorder %s51, %s67
      %p69 = scmp.eq.s32.totalorder %s22, 0
      %p70 = por %p68, %p69
      %s71 = ssub.s32 %s16, %s23
      %p72 = scmp.eq.s32.totalorder %s71, 0
      %s74 = sadd.s32 %s73, 1
      %s75 = scalar_select %p72, %s73, %s74
      %p78 = pneg %p72
      %p79 = scmp.eq.s32.totalorder %s16, 1
      %p80 = por %p78, %p79
      %p81 = scmp.ne.s32.totalorder %s73, %s76
      %p82 = scmp.eq.s32.totalorder %s16, 0
      %p83 = por %p81, %p82
      %p84 = scmp.ne.s32.totalorder %s73, %s76
      %p85 = scmp.eq.s32.totalorder %s21, 1
      %p86 = por %p84, %p85
      %p87 = scmp.ne.s32.totalorder %s76, %s77
      %p88 = scmp.eq.s32.totalorder %s21, 0
      %p89 = por %p87, %p88
      %p90 = scmp.ne.s32.totalorder %s76, %s77
      %p91 = scmp.eq.s32.totalorder %s22, 1
      %p92 = por %p90, %p91
      %p94 = scmp.ne.s32.totalorder %s77, %s93
      %p95 = scmp.eq.s32.totalorder %s22, 0
      %p96 = por %p94, %p95
      %s97 = ssub.s32 %s16, %s23
      %p98 = scmp.eq.s32.totalorder %s97, 0
      %s100 = sadd.s32 %s99, 1
      %s101 = scalar_select %p98, %s99, %s100
      %p104 = pneg %p98
      %p105 = scmp.eq.s32.totalorder %s16, 1
      %p106 = por %p104, %p105
      %p107 = scmp.ne.s32.totalorder %s99, %s102
      %p108 = scmp.eq.s32.totalorder %s16, 0
      %p109 = por %p107, %p108
      %p110 = scmp.ne.s32.totalorder %s99, %s102
      %p111 = scmp.eq.s32.totalorder %s21, 1
      %p112 = por %p110, %p111
      %p113 = scmp.ne.s32.totalorder %s102, %s103
      %p114 = scmp.eq.s32.totalorder %s21, 0
      %p115 = por %p113, %p114
      %p116 = scmp.ne.s32.totalorder %s102, %s103
      %p117 = scmp.eq.s32.totalorder %s22, 1
      %p118 = por %p116, %p117
      %p120 = scmp.ne.s32.totalorder %s103, %s119
      %p121 = scmp.eq.s32.totalorder %s22, 0
      %p122 = por %p120, %p121
      %s123 = ssub.s32 %s16, %s23
      %p124 = scmp.eq.s32.totalorder %s123, 0
      %s126 = sadd.s32 %s125, 1
      %s127 = scalar_select %p124, %s125, %s126
      %p130 = pneg %p124
      %p131 = scmp.eq.s32.totalorder %s16, 1
      %p132 = por %p130, %p131
      %p133 = scmp.ne.s32.totalorder %s125, %s128
      %p134 = scmp.eq.s32.totalorder %s16, 0
      %p135 = por %p133, %p134
      %p136 = scmp.ne.s32.totalorder %s125, %s128
      %p137 = scmp.eq.s32.totalorder %s21, 1
      %p138 = por %p136, %p137
      %p139 = scmp.ne.s32.totalorder %s128, %s129
      %p140 = scmp.eq.s32.totalorder %s21, 0
      %p141 = por %p139, %p140
      %p142 = scmp.ne.s32.totalorder %s128, %s129
      %p143 = scmp.eq.s32.totalorder %s22, 1
      %p144 = por %p142, %p143
      %p146 = scmp.ne.s32.totalorder %s129, %s145
      %p147 = scmp.eq.s32.totalorder %s22, 0
      %p148 = por %p146, %p147
      %p149 = scmp.le.s32.totalorder 1, %s16
      %p150 = scmp.lt.s32.totalorder %s16, 3
      %p151 = pnand %p149, %p150
      %p152 = pneg %p151
      // Predicated region
      $region9: #{_lambda_.1} parent=5 // pred_check
        _
      $region10: #{_lambda_.1} parent=5 // pred_check_branch
        %154 = sbr.rel (%p151) target = $region12
      $region11: #{_lambda_.1} parent=5 // pred_region
        %s155 = ssub.s32 %s16, 1
        // Predicated region
        $region13: #{_lambda_.1} parent=11 // pred_check
          %p156 = pneg %p37
        $region14: #{_lambda_.1} parent=11 // pred_check_branch
          %158 = sbr.rel (%p156) target = $region16
        $region15: #{_lambda_.1} parent=11 // pred_region
          _
        $region16: #{_lambda_.1} parent=11 // pred_fallthru
          _
      $region12: #{_lambda_.1} parent=5 // pred_fallthru
        _
      %p159 = scmp.lt.s32.totalorder %s16, 2
      // Predicated region
      $region17: #{_lambda_.1} parent=5 // pred_check
        %p160 = pneg %p159
      $region18: #{_lambda_.1} parent=5 // pred_check_branch
        %162 = sbr.rel (%p160) target = $region20
      $region19: #{_lambda_.1} parent=5 // pred_region
        // Predicated region
        $region21: #{_lambda_.1} parent=19 // pred_check
          %p163 = pneg %p57
        $region22: #{_lambda_.1} parent=19 // pred_check_branch
          %165 = sbr.rel (%p163) target = $region24
        $region23: #{_lambda_.1} parent=19 // pred_region
          %s166 = sand.u32 %s47, 1
          %s167 = scalar_lea.sflag [#allocation3], %s166
          %s168 = sand.u32 %s47, 1
          %s169 = smul.addr %s168, 1548
          %s170 = scalar_lea.vmem [#allocation2], %s169
          %s171 = smul.u32 9, %s16
          %s173 = ssub.s32 24768, 24768
          %174 = vsyncadd %s167, %s173
          %s175 = smul.addr %s171, 64
          %s176 = scalar_lea.hbm %s1, %s175
          %s177 = sshll.u32 %s170, 4
          %s178 = int_to_ptr.vmem [resolvable:$true] %s177
          %183 = dma.hbm_to_vmem [thread:$0]  %s176, 24768, %s178, %s167, 1152, 576, 36
        $region24: #{_lambda_.1} parent=19 // pred_fallthru
          _
        // Predicated region
        $region25: #{_lambda_.1} parent=19 // pred_check
          %p184 = pneg %p83
        $region26: #{_lambda_.1} parent=19 // pred_check_branch
          %186 = sbr.rel (%p184) target = $region28
        $region27: #{_lambda_.1} parent=19 // pred_region
          %s187 = sand.u32 %s16, 1
          %s188 = scalar_lea.sflag [#allocation5], %s187
          %s189 = sand.u32 %s73, 1
          %s190 = smul.addr %s189, 9
          %s191 = scalar_lea.vmem [#allocation4], %s190
          %s192 = smul.u32 9, %s16
          %s194 = ssub.s32 144, 144
          %195 = vsyncadd %s188, %s194
          %s196 = smul.addr %s192, 16
          %s197 = scalar_lea.hbm %s2, %s196
          %s199 = sshll.u32 %s191, 4
          %s200 = int_to_ptr.vmem [resolvable:$true] %s199
          %202 = dma.hbm_to_vmem [thread:$0]  %s197, 144, %s200, %s188
        $region28: #{_lambda_.1} parent=19 // pred_fallthru
          _
        // Predicated region
        $region29: #{_lambda_.1} parent=19 // pred_check
          %p203 = pneg %p109
        $region30: #{_lambda_.1} parent=19 // pred_check_branch
          %205 = sbr.rel (%p203) target = $region32
        $region31: #{_lambda_.1} parent=19 // pred_region
          %s206 = sand.u32 %s16, 1
          %s207 = scalar_lea.sflag [#allocation5], %s206
          %s208 = sand.u32 %s99, 1
          %s209 = smul.addr %s208, 9
          %s210 = scalar_lea.vmem [#allocation6], %s209
          %s211 = smul.u32 9, %s16
          %s213 = ssub.s32 144, 144
          %214 = vsyncadd %s207, %s213
          %s215 = smul.addr %s211, 16
          %s216 = scalar_lea.hbm %s3, %s215
          %s218 = sshll.u32 %s210, 4
          %s219 = int_to_ptr.vmem [resolvable:$true] %s218
          %221 = dma.hbm_to_vmem [thread:$0]  %s216, 144, %s219, %s207
        $region32: #{_lambda_.1} parent=19 // pred_fallthru
          _
      $region20: #{_lambda_.1} parent=5 // pred_fallthru
        _
      %p222 = scmp.le.s32.totalorder 1, %s16
      %p223 = scmp.lt.s32.totalorder %s16, 3
      %p224 = pnand %p222, %p223
      %p225 = pneg %p224
      // Predicated region
      $region33: #{_lambda_.1} parent=5 // pred_check
        _
      $region34: #{_lambda_.1} parent=5 // pred_check_branch
        %227 = sbr.rel (%p224) target = $region36
      $region35: #{_lambda_.1} parent=5 // pred_region
        %s228 = ssub.s32 %s16, 1
        %s229 = sand.u32 %s50, 1
        %s230 = scalar_lea.sflag [#allocation3], %s229
        %s231 = sand.u32 %s50, 1
        %s232 = smul.addr %s231, 1548
        %s233 = scalar_lea.vmem [#allocation2], %s232
        // Predicated region
        $region37: #{_lambda_.1} parent=35 // pred_check
          %p234 = pneg %p63
        $region38: #{_lambda_.1} parent=35 // pred_check_branch
          %236 = sbr.rel (%p234) target = $region40
        $region39: #{_lambda_.1} parent=35 // pred_region
          %237 = dma.done %s230, 24768
        $region40: #{_lambda_.1} parent=35 // pred_fallthru
          _
        %s238 = sand.u32 %s21, 1
        %s239 = scalar_lea.sflag [#allocation5], %s238
        %s240 = sand.u32 %s76, 1
        %s241 = smul.addr %s240, 9
        %s242 = scalar_lea.vmem [#allocation4], %s241
        // Predicated region
        $region41: #{_lambda_.1} parent=35 // pred_check
          %p243 = pneg %p89
        $region42: #{_lambda_.1} parent=35 // pred_check_branch
          %245 = sbr.rel (%p243) target = $region44
        $region43: #{_lambda_.1} parent=35 // pred_region
          %246 = dma.done %s239, 144
        $region44: #{_lambda_.1} parent=35 // pred_fallthru
          _
        %s247 = sand.u32 %s21, 1
        %s248 = scalar_lea.sflag [#allocation5], %s247
        %s249 = sand.u32 %s102, 1
        %s250 = smul.addr %s249, 9
        %s251 = scalar_lea.vmem [#allocation6], %s250
        // Predicated region
        $region45: #{_lambda_.1} parent=35 // pred_check
          %p252 = pneg %p115
        $region46: #{_lambda_.1} parent=35 // pred_check_branch
          %254 = sbr.rel (%p252) target = $region48
        $region47: #{_lambda_.1} parent=35 // pred_region
          %255 = dma.done %s248, 144
        $region48: #{_lambda_.1} parent=35 // pred_fallthru
          _
        %p256 = pneg %p37
        %p257 = pneg %p34
        %s258 = sand.u32 %s50, 1
        %s259 = scalar_lea.sflag [#allocation3], %s258
        %s260 = sand.u32 %s50, 1
        %s261 = smul.addr %s260, 1548
        %s262 = scalar_lea.vmem [#allocation2], %s261
        %p263 = pneg %p63
        %p264 = pneg %p60
        %s265 = sand.u32 %s21, 1
        %s266 = scalar_lea.sflag [#allocation5], %s265
        %s267 = sand.u32 %s76, 1
        %s268 = smul.addr %s267, 9
        %s269 = scalar_lea.vmem [#allocation4], %s268
        %p270 = pneg %p89
        %p271 = pneg %p86
        %s272 = sand.u32 %s21, 1
        %s273 = scalar_lea.sflag [#allocation5], %s272
        %s274 = sand.u32 %s102, 1
        %s275 = smul.addr %s274, 9
        %s276 = scalar_lea.vmem [#allocation6], %s275
        %p277 = pneg %p115
        %p278 = pneg %p112
        %p279 = pneg %p141
        %p280 = pneg %p138
        %s281 = sand.u32 %s128, 1
        %s282 = sand.u32 %s128, 1
        %s283 = smul.addr %s282, 504
        %s284 = scalar_lea.vmem [#allocation7], %s283
        %s285 = smul.u32 9, %s21
        %s286 = smul.u32 9, %s21
        %s287 = smul.u32 9, %s21
        %s288 = smul.u32 9, %s21
        %v290 = vld [vmem:[%s0] sm:$0xff]
        %v291 = vld [vmem:[%s0 + $0x8] sm:$0xf]
        %v292 = vld [vmem:[%s0 + $0xc] sm:$0xff]
        %v293 = vld [vmem:[%s0 + $0x14] sm:$0xf]
        %v294 = vld [vmem:[%s0 + $0x18] sm:$0xff]
        %v295 = vld [vmem:[%s0 + $0x20] sm:$0xf]
        %v296 = vld [vmem:[%s0 + $0x24] sm:$0xff]
        %v297 = vld [vmem:[%s0 + $0x2c] sm:$0xf]
        %v298 = vld [vmem:[%s0 + $0x30] sm:$0xff]
        %v299 = vld [vmem:[%s0 + $0x38] sm:$0xf]
        %v300 = vld [vmem:[%s0 + $0x3c] sm:$0xff]
        %v301 = vld [vmem:[%s0 + $0x44] sm:$0xf]
        %v302 = vld [vmem:[%s0 + $0x48] sm:$0x11]
        %v303 = vld [vmem:[%s0 + $0x50] sm:$0x1]
        %v304 = vld [vmem:[%s233] sm:$0xff]
        %v305 = vld [vmem:[%s233 + $0x8] sm:$0xff]
        %v306 = vld [vmem:[%s233 + $0x10] sm:$0xff]
        %v307 = vld [vmem:[%s233 + $0x18] sm:$0xff]
        %v308 = vld [vmem:[%s233 + $0x20] sm:$0xf]
        %v309 = vld [vmem:[%s233 + $0x24] sm:$0xff]
        %v310 = vld [vmem:[%s233 + $0x2c] sm:$0xff]
        %v311 = vld [vmem:[%s233 + $0x34] sm:$0xff]
        %v312 = vld [vmem:[%s233 + $0x3c] sm:$0xff]
        %v313 = vld [vmem:[%s233 + $0x44] sm:$0xf]
        %v314 = vld [vmem:[%s233 + $0x48] sm:$0xff]
        %v315 = vld [vmem:[%s233 + $0x50] sm:$0xff]
        %v316 = vld [vmem:[%s233 + $0x58] sm:$0xff]
        %v317 = vld [vmem:[%s233 + $0x60] sm:$0xff]
        %v318 = vld [vmem:[%s233 + $0x68] sm:$0xf]
        %v319 = vld [vmem:[%s233 + $0x6c] sm:$0xff]
        %v320 = vld [vmem:[%s233 + $0x74] sm:$0xff]
        %v321 = vld [vmem:[%s233 + $0x7c] sm:$0xff]
        %v322 = vld [vmem:[%s233 + $0x84] sm:$0xff]
        %v323 = vld [vmem:[%s233 + $0x8c] sm:$0xf]
        %v324 = vld [vmem:[%s233 + $0x90] sm:$0xff]
        %v325 = vld [vmem:[%s233 + $0x98] sm:$0xff]
        %v326 = vld [vmem:[%s233 + $0xa0] sm:$0xff]
        %v327 = vld [vmem:[%s233 + $0xa8] sm:$0xff]
        %v328 = vld [vmem:[%s233 + $0xb0] sm:$0xf]
        %v329 = vld [vmem:[%s233 + $0xb4] sm:$0xff]
        %v330 = vld [vmem:[%s233 + $0xbc] sm:$0xff]
        %v331 = vld [vmem:[%s233 + $0xc4] sm:$0xff]
        %v332 = vld [vmem:[%s233 + $0xcc] sm:$0xff]
        %v333 = vld [vmem:[%s233 + $0xd4] sm:$0xf]
        %v334 = vld [vmem:[%s233 + $0xd8] sm:$0xff]
        %v335 = vld [vmem:[%s233 + $0xe0] sm:$0xff]
        %v336 = vld [vmem:[%s233 + $0xe8] sm:$0xff]
        %v337 = vld [vmem:[%s233 + $0xf0] sm:$0xff]
        %v338 = vld [vmem:[%s233 + $0xf8] sm:$0xf]
        %v339 = vld [vmem:[%s233 + $0xfc] sm:$0xff]
        %v340 = vld [vmem:[%s233 + $0x104] sm:$0xff]
        %v341 = vld [vmem:[%s233 + $0x10c] sm:$0xff]
        %v342 = vld [vmem:[%s233 + $0x114] sm:$0xff]
        %v343 = vld [vmem:[%s233 + $0x11c] sm:$0xf]
        %v344 = vld [vmem:[%s233 + $0x120] sm:$0xff]
        %v345 = vld [vmem:[%s233 + $0x128] sm:$0xff]
        %v346 = vld [vmem:[%s233 + $0x130] sm:$0xff]
        %v347 = vld [vmem:[%s233 + $0x138] sm:$0xff]
        %v348 = vld [vmem:[%s233 + $0x140] sm:$0xf]
        %v349 = vld [vmem:[%s233 + $0x144] sm:$0xff]
        %v350 = vld [vmem:[%s233 + $0x14c] sm:$0xff]
        %v351 = vld [vmem:[%s233 + $0x154] sm:$0xff]
        %v352 = vld [vmem:[%s233 + $0x15c] sm:$0xff]
        %v353 = vld [vmem:[%s233 + $0x164] sm:$0xf]
        %v354 = vld [vmem:[%s233 + $0x168] sm:$0xff]
        %v355 = vld [vmem:[%s233 + $0x170] sm:$0xff]
        %v356 = vld [vmem:[%s233 + $0x178] sm:$0xff]
        %v357 = vld [vmem:[%s233 + $0x180] sm:$0xff]
        %v358 = vld [vmem:[%s233 + $0x188] sm:$0xf]
        %v359 = vld [vmem:[%s233 + $0x18c] sm:$0xff]
        %v360 = vld [vmem:[%s233 + $0x194] sm:$0xff]
        %v361 = vld [vmem:[%s233 + $0x19c] sm:$0xff]
        %v362 = vld [vmem:[%s233 + $0x1a4] sm:$0xff]
        %v363 = vld [vmem:[%s233 + $0x1ac] sm:$0xf]
        %v364 = vld [vmem:[%s233 + $0x1b0] sm:$0xff]
        %v365 = vld [vmem:[%s233 + $0x1b8] sm:$0xff]
        %v366 = vld [vmem:[%s233 + $0x1c0] sm:$0xff]
        %v367 = vld [vmem:[%s233 + $0x1c8] sm:$0xff]
        %v368 = vld [vmem:[%s233 + $0x1d0] sm:$0xf]
        %v369 = vld [vmem:[%s233 + $0x1d4] sm:$0xff]
        %v370 = vld [vmem:[%s233 + $0x1dc] sm:$0xff]
        %v371 = vld [vmem:[%s233 + $0x1e4] sm:$0xff]
        %v372 = vld [vmem:[%s233 + $0x1ec] sm:$0xff]
        %v373 = vld [vmem:[%s233 + $0x1f4] sm:$0xf]
        %v374 = vld [vmem:[%s233 + $0x1f8] sm:$0xff]
        %v375 = vld [vmem:[%s233 + $0x200] sm:$0xff]
        %v376 = vld [vmem:[%s233 + $0x208] sm:$0xff]
        %v377 = vld [vmem:[%s233 + $0x210] sm:$0xff]
        %v378 = vld [vmem:[%s233 + $0x218] sm:$0xf]
        %v379 = vld [vmem:[%s233 + $0x21c] sm:$0xff]
        %v380 = vld [vmem:[%s233 + $0x224] sm:$0xff]
        %v381 = vld [vmem:[%s233 + $0x22c] sm:$0xff]
        %v382 = vld [vmem:[%s233 + $0x234] sm:$0xff]
        %v383 = vld [vmem:[%s233 + $0x23c] sm:$0xf]
        %v384 = vld [vmem:[%s233 + $0x240] sm:$0xff]
        %v385 = vld [vmem:[%s233 + $0x248] sm:$0xff]
        %v386 = vld [vmem:[%s233 + $0x250] sm:$0xff]
        %v387 = vld [vmem:[%s233 + $0x258] sm:$0xff]
        %v388 = vld [vmem:[%s233 + $0x260] sm:$0xf]
        %v389 = vld [vmem:[%s233 + $0x264] sm:$0xff]
        %v390 = vld [vmem:[%s233 + $0x26c] sm:$0xff]
        %v391 = vld [vmem:[%s233 + $0x274] sm:$0xff]
        %v392 = vld [vmem:[%s233 + $0x27c] sm:$0xff]
        %v393 = vld [vmem:[%s233 + $0x284] sm:$0xf]
        %v394 = vld [vmem:[%s233 + $0x288] sm:$0xff]
        %v395 = vld [vmem:[%s233 + $0x290] sm:$0xff]
        %v396 = vld [vmem:[%s233 + $0x298] sm:$0xff]
        %v397 = vld [vmem:[%s233 + $0x2a0] sm:$0xff]
        %v398 = vld [vmem:[%s233 + $0x2a8] sm:$0xf]
        %v399 = vld [vmem:[%s233 + $0x2ac] sm:$0xff]
        %v400 = vld [vmem:[%s233 + $0x2b4] sm:$0xff]
        %v401 = vld [vmem:[%s233 + $0x2bc] sm:$0xff]
        %v402 = vld [vmem:[%s233 + $0x2c4] sm:$0xff]
        %v403 = vld [vmem:[%s233 + $0x2cc] sm:$0xf]
        %v404 = vld [vmem:[%s233 + $0x2d0] sm:$0xff]
        %v405 = vld [vmem:[%s233 + $0x2d8] sm:$0xff]
        %v406 = vld [vmem:[%s233 + $0x2e0] sm:$0xff]
        %v407 = vld [vmem:[%s233 + $0x2e8] sm:$0xff]
        %v408 = vld [vmem:[%s233 + $0x2f0] sm:$0xf]
        %v409 = vld [vmem:[%s233 + $0x2f4] sm:$0xff]
        %v410 = vld [vmem:[%s233 + $0x2fc] sm:$0xff]
        %v411 = vld [vmem:[%s233 + $0x304] sm:$0xff]
        %v412 = vld [vmem:[%s233 + $0x30c] sm:$0xff]
        %v413 = vld [vmem:[%s233 + $0x314] sm:$0xf]
        %v414 = vld [vmem:[%s233 + $0x318] sm:$0xff]
        %v415 = vld [vmem:[%s233 + $0x320] sm:$0xff]
        %v416 = vld [vmem:[%s233 + $0x328] sm:$0xff]
        %v417 = vld [vmem:[%s233 + $0x330] sm:$0xff]
        %v418 = vld [vmem:[%s233 + $0x338] sm:$0xf]
        %v419 = vld [vmem:[%s233 + $0x33c] sm:$0xff]
        %v420 = vld [vmem:[%s233 + $0x344] sm:$0xff]
        %v421 = vld [vmem:[%s233 + $0x34c] sm:$0xff]
        %v422 = vld [vmem:[%s233 + $0x354] sm:$0xff]
        %v423 = vld [vmem:[%s233 + $0x35c] sm:$0xf]
        %v424 = vld [vmem:[%s233 + $0x360] sm:$0xff]
        %v425 = vld [vmem:[%s233 + $0x368] sm:$0xff]
        %v426 = vld [vmem:[%s233 + $0x370] sm:$0xff]
        %v427 = vld [vmem:[%s233 + $0x378] sm:$0xff]
        %v428 = vld [vmem:[%s233 + $0x380] sm:$0xf]
        %v429 = vld [vmem:[%s233 + $0x384] sm:$0xff]
        %v430 = vld [vmem:[%s233 + $0x38c] sm:$0xff]
        %v431 = vld [vmem:[%s233 + $0x394] sm:$0xff]
        %v432 = vld [vmem:[%s233 + $0x39c] sm:$0xff]
        %v433 = vld [vmem:[%s233 + $0x3a4] sm:$0xf]
        %v434 = vld [vmem:[%s233 + $0x3a8] sm:$0xff]
        %v435 = vld [vmem:[%s233 + $0x3b0] sm:$0xff]
        %v436 = vld [vmem:[%s233 + $0x3b8] sm:$0xff]
        %v437 = vld [vmem:[%s233 + $0x3c0] sm:$0xff]
        %v438 = vld [vmem:[%s233 + $0x3c8] sm:$0xf]
        %v439 = vld [vmem:[%s233 + $0x3cc] sm:$0xff]
        %v440 = vld [vmem:[%s233 + $0x3d4] sm:$0xff]
        %v441 = vld [vmem:[%s233 + $0x3dc] sm:$0xff]
        %v442 = vld [vmem:[%s233 + $0x3e4] sm:$0xff]
        %v443 = vld [vmem:[%s233 + $0x3ec] sm:$0xf]
        %v444 = vld [vmem:[%s233 + $0x3f0] sm:$0xff]
        %v445 = vld [vmem:[%s233 + $0x3f8] sm:$0xff]
        %v446 = vld [vmem:[%s233 + $0x400] sm:$0xff]
        %v447 = vld [vmem:[%s233 + $0x408] sm:$0xff]
        %v448 = vld [vmem:[%s233 + $0x410] sm:$0xf]
        %v449 = vld [vmem:[%s233 + $0x414] sm:$0xff]
        %v450 = vld [vmem:[%s233 + $0x41c] sm:$0xff]
        %v451 = vld [vmem:[%s233 + $0x424] sm:$0xff]
        %v452 = vld [vmem:[%s233 + $0x42c] sm:$0xff]
        %v453 = vld [vmem:[%s233 + $0x434] sm:$0xf]
        %v454 = vld [vmem:[%s233 + $0x438] sm:$0xff]
        %v455 = vld [vmem:[%s233 + $0x440] sm:$0xff]
        %v456 = vld [vmem:[%s233 + $0x448] sm:$0xff]
        %v457 = vld [vmem:[%s233 + $0x450] sm:$0xff]
        %v458 = vld [vmem:[%s233 + $0x458] sm:$0xf]
        %v459 = vld [vmem:[%s233 + $0x45c] sm:$0xff]
        %v460 = vld [vmem:[%s233 + $0x464] sm:$0xff]
        %v461 = vld [vmem:[%s233 + $0x46c] sm:$0xff]
        %v462 = vld [vmem:[%s233 + $0x474] sm:$0xff]
        %v463 = vld [vmem:[%s233 + $0x47c] sm:$0xf]
        %v464 = vld [vmem:[%s233 + $0x480] sm:$0xff]
        %v465 = vld [vmem:[%s233 + $0x488] sm:$0xff]
        %v466 = vld [vmem:[%s233 + $0x490] sm:$0xff]
        %v467 = vld [vmem:[%s233 + $0x498] sm:$0xff]
        %v468 = vld [vmem:[%s233 + $0x4a0] sm:$0xf]
        %v469 = vld [vmem:[%s233 + $0x4a4] sm:$0xff]
        %v470 = vld [vmem:[%s233 + $0x4ac] sm:$0xff]
        %v471 = vld [vmem:[%s233 + $0x4b4] sm:$0xff]
        %v472 = vld [vmem:[%s233 + $0x4bc] sm:$0xff]
        %v473 = vld [vmem:[%s233 + $0x4c4] sm:$0xf]
        %v474 = vld [vmem:[%s233 + $0x4c8] sm:$0xff]
        %v475 = vld [vmem:[%s233 + $0x4d0] sm:$0xff]
        %v476 = vld [vmem:[%s233 + $0x4d8] sm:$0xff]
        %v477 = vld [vmem:[%s233 + $0x4e0] sm:$0xff]
        %v478 = vld [vmem:[%s233 + $0x4e8] sm:$0xf]
        %v479 = vld [vmem:[%s233 + $0x4ec] sm:$0xff]
        %v480 = vld [vmem:[%s233 + $0x4f4] sm:$0xff]
        %v481 = vld [vmem:[%s233 + $0x4fc] sm:$0xff]
        %v482 = vld [vmem:[%s233 + $0x504] sm:$0xff]
        %v483 = vld [vmem:[%s233 + $0x50c] sm:$0xf]
        %v484 = vld [vmem:[%s233 + $0x510] sm:$0xff]
        %v485 = vld [vmem:[%s233 + $0x518] sm:$0xff]
        %v486 = vld [vmem:[%s233 + $0x520] sm:$0xff]
        %v487 = vld [vmem:[%s233 + $0x528] sm:$0xff]
        %v488 = vld [vmem:[%s233 + $0x530] sm:$0xf]
        %v489 = vld [vmem:[%s233 + $0x534] sm:$0xff]
        %v490 = vld [vmem:[%s233 + $0x53c] sm:$0xff]
        %v491 = vld [vmem:[%s233 + $0x544] sm:$0xff]
        %v492 = vld [vmem:[%s233 + $0x54c] sm:$0xff]
        %v493 = vld [vmem:[%s233 + $0x554] sm:$0xf]
        %v494 = vld [vmem:[%s233 + $0x558] sm:$0xff]
        %v495 = vld [vmem:[%s233 + $0x560] sm:$0xff]
        %v496 = vld [vmem:[%s233 + $0x568] sm:$0xff]
        %v497 = vld [vmem:[%s233 + $0x570] sm:$0xff]
        %v498 = vld [vmem:[%s233 + $0x578] sm:$0xf]
        %v499 = vld [vmem:[%s233 + $0x57c] sm:$0xff]
        %v500 = vld [vmem:[%s233 + $0x584] sm:$0xff]
        %v501 = vld [vmem:[%s233 + $0x58c] sm:$0xff]
        %v502 = vld [vmem:[%s233 + $0x594] sm:$0xff]
        %v503 = vld [vmem:[%s233 + $0x59c] sm:$0xf]
        %v504 = vld [vmem:[%s233 + $0x5a0] sm:$0xff]
        %v505 = vld [vmem:[%s233 + $0x5a8] sm:$0xff]
        %v506 = vld [vmem:[%s233 + $0x5b0] sm:$0xff]
        %v507 = vld [vmem:[%s233 + $0x5b8] sm:$0xff]
        %v508 = vld [vmem:[%s233 + $0x5c0] sm:$0xf]
        %v509 = vld [vmem:[%s233 + $0x5c4] sm:$0xff]
        %v510 = vld [vmem:[%s233 + $0x5cc] sm:$0xff]
        %v511 = vld [vmem:[%s233 + $0x5d4] sm:$0xff]
        %v512 = vld [vmem:[%s233 + $0x5dc] sm:$0xff]
        %v513 = vld [vmem:[%s233 + $0x5e4] sm:$0xf]
        %v514 = vld [vmem:[%s233 + $0x5e8] sm:$0xff]
        %v515 = vld [vmem:[%s233 + $0x5f0] sm:$0xff]
        %v516 = vld [vmem:[%s233 + $0x5f8] sm:$0xff]
        %v517 = vld [vmem:[%s233 + $0x600] sm:$0xff]
        %v518 = vld [vmem:[%s233 + $0x608] sm:$0xf]
        %v533 = vunpack.c.l.b16 %v290
        %v534 = vunpack.c.h.b16 %v290
        %v535 = vunpack.c.l.b16 %v291
        %v536 = vunpack.c.l.b16 %v292
        %v537 = vunpack.c.h.b16 %v292
        %v538 = vunpack.c.l.b16 %v293
        %v539 = vunpack.c.l.b16 %v294
        %v540 = vunpack.c.h.b16 %v294
        %v541 = vunpack.c.l.b16 %v295
        %v542 = vunpack.c.l.b16 %v296
        %v543 = vunpack.c.h.b16 %v296
        %v544 = vunpack.c.l.b16 %v297
        %v545 = vunpack.c.l.b16 %v298
        %v546 = vunpack.c.h.b16 %v298
        %v547 = vunpack.c.l.b16 %v299
        %v548 = vunpack.c.l.b16 %v300
        %v549 = vunpack.c.h.b16 %v300
        %v550 = vunpack.c.l.b16 %v301
        %v551 = vunpack.c.l.b16 %v302
        %v552 = vunpack.c.h.b16 %v302
        %v553 = vunpack.c.l.b16 %v303
        %v554 = vpack.c.b16 %v536, %v533
        %v555 = vpack.c.b16 %v537, %v534
        %v556 = vpack.c.b16 %v538, %v535
        %v557 = vpack.c.b16 %v542, %v539
        %v558 = vpack.c.b16 %v543, %v540
        %v559 = vpack.c.b16 %v544, %v541
        %v560 = vpack.c.b16 %v548, %v545
        %v561 = vpack.c.b16 %v549, %v546
        %v562 = vpack.c.b16 %v550, %v547
        %v563 = vpack.c.b16 %v551, %v551
        %v564 = vpack.c.b16 %v552, %v552
        %v565 = vpack.c.b16 %v553, %v553
        %v789 = vunpack.c.l.b16 %v304
        %v790 = vunpack.c.h.b16 %v304
        %v791 = vunpack.c.l.b16 %v305
        %v792 = vunpack.c.h.b16 %v305
        %v793 = vunpack.c.l.b16 %v306
        %v794 = vunpack.c.h.b16 %v306
        %v795 = vunpack.c.l.b16 %v307
        %v796 = vunpack.c.h.b16 %v307
        %v797 = vunpack.c.l.b16 %v308
        %v798 = vunpack.c.l.b16 %v309
        %v799 = vunpack.c.h.b16 %v309
        %v800 = vunpack.c.l.b16 %v310
        %v801 = vunpack.c.h.b16 %v310
        %v802 = vunpack.c.l.b16 %v311
        %v803 = vunpack.c.h.b16 %v311
        %v804 = vunpack.c.l.b16 %v312
        %v805 = vunpack.c.h.b16 %v312
        %v806 = vunpack.c.l.b16 %v313
        %v807 = vunpack.c.l.b16 %v314
        %v808 = vunpack.c.h.b16 %v314
        %v809 = vunpack.c.l.b16 %v315
        %v810 = vunpack.c.h.b16 %v315
        %v811 = vunpack.c.l.b16 %v316
        %v812 = vunpack.c.h.b16 %v316
        %v813 = vunpack.c.l.b16 %v317
        %v814 = vunpack.c.h.b16 %v317
        %v815 = vunpack.c.l.b16 %v318
        %v816 = vunpack.c.l.b16 %v319
        %v817 = vunpack.c.h.b16 %v319
        %v818 = vunpack.c.l.b16 %v320
        %v819 = vunpack.c.h.b16 %v320
        %v820 = vunpack.c.l.b16 %v321
        %v821 = vunpack.c.h.b16 %v321
        %v822 = vunpack.c.l.b16 %v322
        %v823 = vunpack.c.h.b16 %v322
        %v824 = vunpack.c.l.b16 %v323
        %v825 = vunpack.c.l.b16 %v324
        %v826 = vunpack.c.h.b16 %v324
        %v827 = vunpack.c.l.b16 %v325
        %v828 = vunpack.c.h.b16 %v325
        %v829 = vunpack.c.l.b16 %v326
        %v830 = vunpack.c.h.b16 %v326
        %v831 = vunpack.c.l.b16 %v327
        %v832 = vunpack.c.h.b16 %v327
        %v833 = vunpack.c.l.b16 %v328
        %v834 = vunpack.c.l.b16 %v329
        %v835 = vunpack.c.h.b16 %v329
        %v836 = vunpack.c.l.b16 %v330
        %v837 = vunpack.c.h.b16 %v330
        %v838 = vunpack.c.l.b16 %v331
        %v839 = vunpack.c.h.b16 %v331
        %v840 = vunpack.c.l.b16 %v332
        %v841 = vunpack.c.h.b16 %v332
        %v842 = vunpack.c.l.b16 %v333
        %v843 = vunpack.c.l.b16 %v334
        %v844 = vunpack.c.h.b16 %v334
        %v845 = vunpack.c.l.b16 %v335
        %v846 = vunpack.c.h.b16 %v335
        %v847 = vunpack.c.l.b16 %v336
        %v848 = vunpack.c.h.b16 %v336
        %v849 = vunpack.c.l.b16 %v337
        %v850 = vunpack.c.h.b16 %v337
        %v851 = vunpack.c.l.b16 %v338
        %v852 = vunpack.c.l.b16 %v339
        %v853 = vunpack.c.h.b16 %v339
        %v854 = vunpack.c.l.b16 %v340
        %v855 = vunpack.c.h.b16 %v340
        %v856 = vunpack.c.l.b16 %v341
        %v857 = vunpack.c.h.b16 %v341
        %v858 = vunpack.c.l.b16 %v342
        %v859 = vunpack.c.h.b16 %v342
        %v860 = vunpack.c.l.b16 %v343
        %v861 = vunpack.c.l.b16 %v344
        %v862 = vunpack.c.h.b16 %v344
        %v863 = vunpack.c.l.b16 %v345
        %v864 = vunpack.c.h.b16 %v345
        %v865 = vunpack.c.l.b16 %v346
        %v866 = vunpack.c.h.b16 %v346
        %v867 = vunpack.c.l.b16 %v347
        %v868 = vunpack.c.h.b16 %v347
        %v869 = vunpack.c.l.b16 %v348
        %v870 = vunpack.c.l.b16 %v349
        %v871 = vunpack.c.h.b16 %v349
        %v872 = vunpack.c.l.b16 %v350
        %v873 = vunpack.c.h.b16 %v350
        %v874 = vunpack.c.l.b16 %v351
        %v875 = vunpack.c.h.b16 %v351
        %v876 = vunpack.c.l.b16 %v352
        %v877 = vunpack.c.h.b16 %v352
        %v878 = vunpack.c.l.b16 %v353
        %v879 = vunpack.c.l.b16 %v354
        %v880 = vunpack.c.h.b16 %v354
        %v881 = vunpack.c.l.b16 %v355
        %v882 = vunpack.c.h.b16 %v355
        %v883 = vunpack.c.l.b16 %v356
        %v884 = vunpack.c.h.b16 %v356
        %v885 = vunpack.c.l.b16 %v357
        %v886 = vunpack.c.h.b16 %v357
        %v887 = vunpack.c.l.b16 %v358
        %v888 = vunpack.c.l.b16 %v359
        %v889 = vunpack.c.h.b16 %v359
        %v890 = vunpack.c.l.b16 %v360
        %v891 = vunpack.c.h.b16 %v360
        %v892 = vunpack.c.l.b16 %v361
        %v893 = vunpack.c.h.b16 %v361
        %v894 = vunpack.c.l.b16 %v362
        %v895 = vunpack.c.h.b16 %v362
        %v896 = vunpack.c.l.b16 %v363
        %v897 = vunpack.c.l.b16 %v364
        %v898 = vunpack.c.h.b16 %v364
        %v899 = vunpack.c.l.b16 %v365
        %v900 = vunpack.c.h.b16 %v365
        %v901 = vunpack.c.l.b16 %v366
        %v902 = vunpack.c.h.b16 %v366
        %v903 = vunpack.c.l.b16 %v367
        %v904 = vunpack.c.h.b16 %v367
        %v905 = vunpack.c.l.b16 %v368
        %v906 = vunpack.c.l.b16 %v369
        %v907 = vunpack.c.h.b16 %v369
        %v908 = vunpack.c.l.b16 %v370
        %v909 = vunpack.c.h.b16 %v370
        %v910 = vunpack.c.l.b16 %v371
        %v911 = vunpack.c.h.b16 %v371
        %v912 = vunpack.c.l.b16 %v372
        %v913 = vunpack.c.h.b16 %v372
        %v914 = vunpack.c.l.b16 %v373
        %v915 = vunpack.c.l.b16 %v374
        %v916 = vunpack.c.h.b16 %v374
        %v917 = vunpack.c.l.b16 %v375
        %v918 = vunpack.c.h.b16 %v375
        %v919 = vunpack.c.l.b16 %v376
        %v920 = vunpack.c.h.b16 %v376
        %v921 = vunpack.c.l.b16 %v377
        %v922 = vunpack.c.h.b16 %v377
        %v923 = vunpack.c.l.b16 %v378
        %v924 = vunpack.c.l.b16 %v379
        %v925 = vunpack.c.h.b16 %v379
        %v926 = vunpack.c.l.b16 %v380
        %v927 = vunpack.c.h.b16 %v380
        %v928 = vunpack.c.l.b16 %v381
        %v929 = vunpack.c.h.b16 %v381
        %v930 = vunpack.c.l.b16 %v382
        %v931 = vunpack.c.h.b16 %v382
        %v932 = vunpack.c.l.b16 %v383
        %v933 = vunpack.c.l.b16 %v384
        %v934 = vunpack.c.h.b16 %v384
        %v935 = vunpack.c.l.b16 %v385
        %v936 = vunpack.c.h.b16 %v385
        %v937 = vunpack.c.l.b16 %v386
        %v938 = vunpack.c.h.b16 %v386
        %v939 = vunpack.c.l.b16 %v387
        %v940 = vunpack.c.h.b16 %v387
        %v941 = vunpack.c.l.b16 %v388
        %v942 = vunpack.c.l.b16 %v389
        %v943 = vunpack.c.h.b16 %v389
        %v944 = vunpack.c.l.b16 %v390
        %v945 = vunpack.c.h.b16 %v390
        %v946 = vunpack.c.l.b16 %v391
        %v947 = vunpack.c.h.b16 %v391
        %v948 = vunpack.c.l.b16 %v392
        %v949 = vunpack.c.h.b16 %v392
        %v950 = vunpack.c.l.b16 %v393
        %v951 = vunpack.c.l.b16 %v394
        %v952 = vunpack.c.h.b16 %v394
        %v953 = vunpack.c.l.b16 %v395
        %v954 = vunpack.c.h.b16 %v395
        %v955 = vunpack.c.l.b16 %v396
        %v956 = vunpack.c.h.b16 %v396
        %v957 = vunpack.c.l.b16 %v397
        %v958 = vunpack.c.h.b16 %v397
        %v959 = vunpack.c.l.b16 %v398
        %v960 = vunpack.c.l.b16 %v399
        %v961 = vunpack.c.h.b16 %v399
        %v962 = vunpack.c.l.b16 %v400
        %v963 = vunpack.c.h.b16 %v400
        %v964 = vunpack.c.l.b16 %v401
        %v965 = vunpack.c.h.b16 %v401
        %v966 = vunpack.c.l.b16 %v402
        %v967 = vunpack.c.h.b16 %v402
        %v968 = vunpack.c.l.b16 %v403
        %v969 = vunpack.c.l.b16 %v404
        %v970 = vunpack.c.h.b16 %v404
        %v971 = vunpack.c.l.b16 %v405
        %v972 = vunpack.c.h.b16 %v405
        %v973 = vunpack.c.l.b16 %v406
        %v974 = vunpack.c.h.b16 %v406
        %v975 = vunpack.c.l.b16 %v407
        %v976 = vunpack.c.h.b16 %v407
        %v977 = vunpack.c.l.b16 %v408
        %v978 = vunpack.c.l.b16 %v409
        %v979 = vunpack.c.h.b16 %v409
        %v980 = vunpack.c.l.b16 %v410
        %v981 = vunpack.c.h.b16 %v410
        %v982 = vunpack.c.l.b16 %v411
        %v983 = vunpack.c.h.b16 %v411
        %v984 = vunpack.c.l.b16 %v412
        %v985 = vunpack.c.h.b16 %v412
        %v986 = vunpack.c.l.b16 %v413
        %v987 = vunpack.c.l.b16 %v414
        %v988 = vunpack.c.h.b16 %v414
        %v989 = vunpack.c.l.b16 %v415
        %v990 = vunpack.c.h.b16 %v415
        %v991 = vunpack.c.l.b16 %v416
        %v992 = vunpack.c.h.b16 %v416
        %v993 = vunpack.c.l.b16 %v417
        %v994 = vunpack.c.h.b16 %v417
        %v995 = vunpack.c.l.b16 %v418
        %v996 = vunpack.c.l.b16 %v419
        %v997 = vunpack.c.h.b16 %v419
        %v998 = vunpack.c.l.b16 %v420
        %v999 = vunpack.c.h.b16 %v420
        %v1000 = vunpack.c.l.b16 %v421
        %v1001 = vunpack.c.h.b16 %v421
        %v1002 = vunpack.c.l.b16 %v422
        %v1003 = vunpack.c.h.b16 %v422
        %v1004 = vunpack.c.l.b16 %v423
        %v1005 = vunpack.c.l.b16 %v424
        %v1006 = vunpack.c.h.b16 %v424
        %v1007 = vunpack.c.l.b16 %v425
        %v1008 = vunpack.c.h.b16 %v425
        %v1009 = vunpack.c.l.b16 %v426
        %v1010 = vunpack.c.h.b16 %v426
        %v1011 = vunpack.c.l.b16 %v427
        %v1012 = vunpack.c.h.b16 %v427
        %v1013 = vunpack.c.l.b16 %v428
        %v1014 = vunpack.c.l.b16 %v429
        %v1015 = vunpack.c.h.b16 %v429
        %v1016 = vunpack.c.l.b16 %v430
        %v1017 = vunpack.c.h.b16 %v430
        %v1018 = vunpack.c.l.b16 %v431
        %v1019 = vunpack.c.h.b16 %v431
        %v1020 = vunpack.c.l.b16 %v432
        %v1021 = vunpack.c.h.b16 %v432
        %v1022 = vunpack.c.l.b16 %v433
        %v1023 = vunpack.c.l.b16 %v434
        %v1024 = vunpack.c.h.b16 %v434
        %v1025 = vunpack.c.l.b16 %v435
        %v1026 = vunpack.c.h.b16 %v435
        %v1027 = vunpack.c.l.b16 %v436
        %v1028 = vunpack.c.h.b16 %v436
        %v1029 = vunpack.c.l.b16 %v437
        %v1030 = vunpack.c.h.b16 %v437
        %v1031 = vunpack.c.l.b16 %v438
        %v1032 = vunpack.c.l.b16 %v439
        %v1033 = vunpack.c.h.b16 %v439
        %v1034 = vunpack.c.l.b16 %v440
        %v1035 = vunpack.c.h.b16 %v440
        %v1036 = vunpack.c.l.b16 %v441
        %v1037 = vunpack.c.h.b16 %v441
        %v1038 = vunpack.c.l.b16 %v442
        %v1039 = vunpack.c.h.b16 %v442
        %v1040 = vunpack.c.l.b16 %v443
        %v1041 = vunpack.c.l.b16 %v444
        %v1042 = vunpack.c.h.b16 %v444
        %v1043 = vunpack.c.l.b16 %v445
        %v1044 = vunpack.c.h.b16 %v445
        %v1045 = vunpack.c.l.b16 %v446
        %v1046 = vunpack.c.h.b16 %v446
        %v1047 = vunpack.c.l.b16 %v447
        %v1048 = vunpack.c.h.b16 %v447
        %v1049 = vunpack.c.l.b16 %v448
        %v1050 = vunpack.c.l.b16 %v449
        %v1051 = vunpack.c.h.b16 %v449
        %v1052 = vunpack.c.l.b16 %v450
        %v1053 = vunpack.c.h.b16 %v450
        %v1054 = vunpack.c.l.b16 %v451
        %v1055 = vunpack.c.h.b16 %v451
        %v1056 = vunpack.c.l.b16 %v452
        %v1057 = vunpack.c.h.b16 %v452
        %v1058 = vunpack.c.l.b16 %v453
        %v1059 = vunpack.c.l.b16 %v454
        %v1060 = vunpack.c.h.b16 %v454
        %v1061 = vunpack.c.l.b16 %v455
        %v1062 = vunpack.c.h.b16 %v455
        %v1063 = vunpack.c.l.b16 %v456
        %v1064 = vunpack.c.h.b16 %v456
        %v1065 = vunpack.c.l.b16 %v457
        %v1066 = vunpack.c.h.b16 %v457
        %v1067 = vunpack.c.l.b16 %v458
        %v1068 = vunpack.c.l.b16 %v459
        %v1069 = vunpack.c.h.b16 %v459
        %v1070 = vunpack.c.l.b16 %v460
        %v1071 = vunpack.c.h.b16 %v460
        %v1072 = vunpack.c.l.b16 %v461
        %v1073 = vunpack.c.h.b16 %v461
        %v1074 = vunpack.c.l.b16 %v462
        %v1075 = vunpack.c.h.b16 %v462
        %v1076 = vunpack.c.l.b16 %v463
        %v1077 = vunpack.c.l.b16 %v464
        %v1078 = vunpack.c.h.b16 %v464
        %v1079 = vunpack.c.l.b16 %v465
        %v1080 = vunpack.c.h.b16 %v465
        %v1081 = vunpack.c.l.b16 %v466
        %v1082 = vunpack.c.h.b16 %v466
        %v1083 = vunpack.c.l.b16 %v467
        %v1084 = vunpack.c.h.b16 %v467
        %v1085 = vunpack.c.l.b16 %v468
        %v1086 = vunpack.c.l.b16 %v469
        %v1087 = vunpack.c.h.b16 %v469
        %v1088 = vunpack.c.l.b16 %v470
        %v1089 = vunpack.c.h.b16 %v470
        %v1090 = vunpack.c.l.b16 %v471
        %v1091 = vunpack.c.h.b16 %v471
        %v1092 = vunpack.c.l.b16 %v472
        %v1093 = vunpack.c.h.b16 %v472
        %v1094 = vunpack.c.l.b16 %v473
        %v1095 = vunpack.c.l.b16 %v474
        %v1096 = vunpack.c.h.b16 %v474
        %v1097 = vunpack.c.l.b16 %v475
        %v1098 = vunpack.c.h.b16 %v475
        %v1099 = vunpack.c.l.b16 %v476
        %v1100 = vunpack.c.h.b16 %v476
        %v1101 = vunpack.c.l.b16 %v477
        %v1102 = vunpack.c.h.b16 %v477
        %v1103 = vunpack.c.l.b16 %v478
        %v1104 = vunpack.c.l.b16 %v479
        %v1105 = vunpack.c.h.b16 %v479
        %v1106 = vunpack.c.l.b16 %v480
        %v1107 = vunpack.c.h.b16 %v480
        %v1108 = vunpack.c.l.b16 %v481
        %v1109 = vunpack.c.h.b16 %v481
        %v1110 = vunpack.c.l.b16 %v482
        %v1111 = vunpack.c.h.b16 %v482
        %v1112 = vunpack.c.l.b16 %v483
        %v1113 = vunpack.c.l.b16 %v484
        %v1114 = vunpack.c.h.b16 %v484
        %v1115 = vunpack.c.l.b16 %v485
        %v1116 = vunpack.c.h.b16 %v485
        %v1117 = vunpack.c.l.b16 %v486
        %v1118 = vunpack.c.h.b16 %v486
        %v1119 = vunpack.c.l.b16 %v487
        %v1120 = vunpack.c.h.b16 %v487
        %v1121 = vunpack.c.l.b16 %v488
        %v1122 = vunpack.c.l.b16 %v489
        %v1123 = vunpack.c.h.b16 %v489
        %v1124 = vunpack.c.l.b16 %v490
        %v1125 = vunpack.c.h.b16 %v490
        %v1126 = vunpack.c.l.b16 %v491
        %v1127 = vunpack.c.h.b16 %v491
        %v1128 = vunpack.c.l.b16 %v492
        %v1129 = vunpack.c.h.b16 %v492
        %v1130 = vunpack.c.l.b16 %v493
        %v1131 = vunpack.c.l.b16 %v494
        %v1132 = vunpack.c.h.b16 %v494
        %v1133 = vunpack.c.l.b16 %v495
        %v1134 = vunpack.c.h.b16 %v495
        %v1135 = vunpack.c.l.b16 %v496
        %v1136 = vunpack.c.h.b16 %v496
        %v1137 = vunpack.c.l.b16 %v497
        %v1138 = vunpack.c.h.b16 %v497
        %v1139 = vunpack.c.l.b16 %v498
        %v1140 = vunpack.c.l.b16 %v499
        %v1141 = vunpack.c.h.b16 %v499
        %v1142 = vunpack.c.l.b16 %v500
        %v1143 = vunpack.c.h.b16 %v500
        %v1144 = vunpack.c.l.b16 %v501
        %v1145 = vunpack.c.h.b16 %v501
        %v1146 = vunpack.c.l.b16 %v502
        %v1147 = vunpack.c.h.b16 %v502
        %v1148 = vunpack.c.l.b16 %v503
        %v1149 = vunpack.c.l.b16 %v504
        %v1150 = vunpack.c.h.b16 %v504
        %v1151 = vunpack.c.l.b16 %v505
        %v1152 = vunpack.c.h.b16 %v505
        %v1153 = vunpack.c.l.b16 %v506
        %v1154 = vunpack.c.h.b16 %v506
        %v1155 = vunpack.c.l.b16 %v507
        %v1156 = vunpack.c.h.b16 %v507
        %v1157 = vunpack.c.l.b16 %v508
        %v1158 = vunpack.c.l.b16 %v509
        %v1159 = vunpack.c.h.b16 %v509
        %v1160 = vunpack.c.l.b16 %v510
        %v1161 = vunpack.c.h.b16 %v510
        %v1162 = vunpack.c.l.b16 %v511
        %v1163 = vunpack.c.h.b16 %v511
        %v1164 = vunpack.c.l.b16 %v512
        %v1165 = vunpack.c.h.b16 %v512
        %v1166 = vunpack.c.l.b16 %v513
        %v1167 = vunpack.c.l.b16 %v514
        %v1168 = vunpack.c.h.b16 %v514
        %v1169 = vunpack.c.l.b16 %v515
        %v1170 = vunpack.c.h.b16 %v515
        %v1171 = vunpack.c.l.b16 %v516
        %v1172 = vunpack.c.h.b16 %v516
        %v1173 = vunpack.c.l.b16 %v517
        %v1174 = vunpack.c.h.b16 %v517
        %v1175 = vunpack.c.l.b16 %v518
        %v1176 = vpack.c.b16 %v798, %v789
        %v1177 = vpack.c.b16 %v799, %v790
        %v1178 = vpack.c.b16 %v800, %v791
        %v1179 = vpack.c.b16 %v801, %v792
        %v1180 = vpack.c.b16 %v802, %v793
        %v1181 = vpack.c.b16 %v803, %v794
        %v1182 = vpack.c.b16 %v804, %v795
        %v1183 = vpack.c.b16 %v805, %v796
        %v1184 = vpack.c.b16 %v806, %v797
        %v1185 = vpack.c.b16 %v816, %v807
        %v1186 = vpack.c.b16 %v817, %v808
        %v1187 = vpack.c.b16 %v818, %v809
        %v1188 = vpack.c.b16 %v819, %v810
        %v1189 = vpack.c.b16 %v820, %v811
        %v1190 = vpack.c.b16 %v821, %v812
        %v1191 = vpack.c.b16 %v822, %v813
        %v1192 = vpack.c.b16 %v823, %v814
        %v1193 = vpack.c.b16 %v824, %v815
        %v1194 = vpack.c.b16 %v834, %v825
        %v1195 = vpack.c.b16 %v835, %v826
        %v1196 = vpack.c.b16 %v836, %v827
        %v1197 = vpack.c.b16 %v837, %v828
        %v1198 = vpack.c.b16 %v838, %v829
        %v1199 = vpack.c.b16 %v839, %v830
        %v1200 = vpack.c.b16 %v840, %v831
        %v1201 = vpack.c.b16 %v841, %v832
        %v1202 = vpack.c.b16 %v842, %v833
        %v1203 = vpack.c.b16 %v852, %v843
        %v1204 = vpack.c.b16 %v853, %v844
        %v1205 = vpack.c.b16 %v854, %v845
        %v1206 = vpack.c.b16 %v855, %v846
        %v1207 = vpack.c.b16 %v856, %v847
        %v1208 = vpack.c.b16 %v857, %v848
        %v1209 = vpack.c.b16 %v858, %v849
        %v1210 = vpack.c.b16 %v859, %v850
        %v1211 = vpack.c.b16 %v860, %v851
        %v1212 = vpack.c.b16 %v870, %v861
        %v1213 = vpack.c.b16 %v871, %v862
        %v1214 = vpack.c.b16 %v872, %v863
        %v1215 = vpack.c.b16 %v873, %v864
        %v1216 = vpack.c.b16 %v874, %v865
        %v1217 = vpack.c.b16 %v875, %v866
        %v1218 = vpack.c.b16 %v876, %v867
        %v1219 = vpack.c.b16 %v877, %v868
        %v1220 = vpack.c.b16 %v878, %v869
        %v1221 = vpack.c.b16 %v888, %v879
        %v1222 = vpack.c.b16 %v889, %v880
        %v1223 = vpack.c.b16 %v890, %v881
        %v1224 = vpack.c.b16 %v891, %v882
        %v1225 = vpack.c.b16 %v892, %v883
        %v1226 = vpack.c.b16 %v893, %v884
        %v1227 = vpack.c.b16 %v894, %v885
        %v1228 = vpack.c.b16 %v895, %v886
        %v1229 = vpack.c.b16 %v896, %v887
        %v1230 = vpack.c.b16 %v906, %v897
        %v1231 = vpack.c.b16 %v907, %v898
        %v1232 = vpack.c.b16 %v908, %v899
        %v1233 = vpack.c.b16 %v909, %v900
        %v1234 = vpack.c.b16 %v910, %v901
        %v1235 = vpack.c.b16 %v911, %v902
        %v1236 = vpack.c.b16 %v912, %v903
        %v1237 = vpack.c.b16 %v913, %v904
        %v1238 = vpack.c.b16 %v914, %v905
        %v1239 = vpack.c.b16 %v924, %v915
        %v1240 = vpack.c.b16 %v925, %v916
        %v1241 = vpack.c.b16 %v926, %v917
        %v1242 = vpack.c.b16 %v927, %v918
        %v1243 = vpack.c.b16 %v928, %v919
        %v1244 = vpack.c.b16 %v929, %v920
        %v1245 = vpack.c.b16 %v930, %v921
        %v1246 = vpack.c.b16 %v931, %v922
        %v1247 = vpack.c.b16 %v932, %v923
        %v1248 = vpack.c.b16 %v942, %v933
        %v1249 = vpack.c.b16 %v943, %v934
        %v1250 = vpack.c.b16 %v944, %v935
        %v1251 = vpack.c.b16 %v945, %v936
        %v1252 = vpack.c.b16 %v946, %v937
        %v1253 = vpack.c.b16 %v947, %v938
        %v1254 = vpack.c.b16 %v948, %v939
        %v1255 = vpack.c.b16 %v949, %v940
        %v1256 = vpack.c.b16 %v950, %v941
        %v1257 = vpack.c.b16 %v960, %v951
        %v1258 = vpack.c.b16 %v961, %v952
        %v1259 = vpack.c.b16 %v962, %v953
        %v1260 = vpack.c.b16 %v963, %v954
        %v1261 = vpack.c.b16 %v964, %v955
        %v1262 = vpack.c.b16 %v965, %v956
        %v1263 = vpack.c.b16 %v966, %v957
        %v1264 = vpack.c.b16 %v967, %v958
        %v1265 = vpack.c.b16 %v968, %v959
        %v1266 = vpack.c.b16 %v978, %v969
        %v1267 = vpack.c.b16 %v979, %v970
        %v1268 = vpack.c.b16 %v980, %v971
        %v1269 = vpack.c.b16 %v981, %v972
        %v1270 = vpack.c.b16 %v982, %v973
        %v1271 = vpack.c.b16 %v983, %v974
        %v1272 = vpack.c.b16 %v984, %v975
        %v1273 = vpack.c.b16 %v985, %v976
        %v1274 = vpack.c.b16 %v986, %v977
        %v1275 = vpack.c.b16 %v996, %v987
        %v1276 = vpack.c.b16 %v997, %v988
        %v1277 = vpack.c.b16 %v998, %v989
        %v1278 = vpack.c.b16 %v999, %v990
        %v1279 = vpack.c.b16 %v1000, %v991
        %v1280 = vpack.c.b16 %v1001, %v992
        %v1281 = vpack.c.b16 %v1002, %v993
        %v1282 = vpack.c.b16 %v1003, %v994
        %v1283 = vpack.c.b16 %v1004, %v995
        %v1284 = vpack.c.b16 %v1014, %v1005
        %v1285 = vpack.c.b16 %v1015, %v1006
        %v1286 = vpack.c.b16 %v1016, %v1007
        %v1287 = vpack.c.b16 %v1017, %v1008
        %v1288 = vpack.c.b16 %v1018, %v1009
        %v1289 = vpack.c.b16 %v1019, %v1010
        %v1290 = vpack.c.b16 %v1020, %v1011
        %v1291 = vpack.c.b16 %v1021, %v1012
        %v1292 = vpack.c.b16 %v1022, %v1013
        %v1293 = vpack.c.b16 %v1032, %v1023
        %v1294 = vpack.c.b16 %v1033, %v1024
        %v1295 = vpack.c.b16 %v1034, %v1025
        %v1296 = vpack.c.b16 %v1035, %v1026
        %v1297 = vpack.c.b16 %v1036, %v1027
        %v1298 = vpack.c.b16 %v1037, %v1028
        %v1299 = vpack.c.b16 %v1038, %v1029
        %v1300 = vpack.c.b16 %v1039, %v1030
        %v1301 = vpack.c.b16 %v1040, %v1031
        %v1302 = vpack.c.b16 %v1050, %v1041
        %v1303 = vpack.c.b16 %v1051, %v1042
        %v1304 = vpack.c.b16 %v1052, %v1043
        %v1305 = vpack.c.b16 %v1053, %v1044
        %v1306 = vpack.c.b16 %v1054, %v1045
        %v1307 = vpack.c.b16 %v1055, %v1046
        %v1308 = vpack.c.b16 %v1056, %v1047
        %v1309 = vpack.c.b16 %v1057, %v1048
        %v1310 = vpack.c.b16 %v1058, %v1049
        %v1311 = vpack.c.b16 %v1068, %v1059
        %v1312 = vpack.c.b16 %v1069, %v1060
        %v1313 = vpack.c.b16 %v1070, %v1061
        %v1314 = vpack.c.b16 %v1071, %v1062
        %v1315 = vpack.c.b16 %v1072, %v1063
        %v1316 = vpack.c.b16 %v1073, %v1064
        %v1317 = vpack.c.b16 %v1074, %v1065
        %v1318 = vpack.c.b16 %v1075, %v1066
        %v1319 = vpack.c.b16 %v1076, %v1067
        %v1320 = vpack.c.b16 %v1086, %v1077
        %v1321 = vpack.c.b16 %v1087, %v1078
        %v1322 = vpack.c.b16 %v1088, %v1079
        %v1323 = vpack.c.b16 %v1089, %v1080
        %v1324 = vpack.c.b16 %v1090, %v1081
        %v1325 = vpack.c.b16 %v1091, %v1082
        %v1326 = vpack.c.b16 %v1092, %v1083
        %v1327 = vpack.c.b16 %v1093, %v1084
        %v1328 = vpack.c.b16 %v1094, %v1085
        %v1329 = vpack.c.b16 %v1104, %v1095
        %v1330 = vpack.c.b16 %v1105, %v1096
        %v1331 = vpack.c.b16 %v1106, %v1097
        %v1332 = vpack.c.b16 %v1107, %v1098
        %v1333 = vpack.c.b16 %v1108, %v1099
        %v1334 = vpack.c.b16 %v1109, %v1100
        %v1335 = vpack.c.b16 %v1110, %v1101
        %v1336 = vpack.c.b16 %v1111, %v1102
        %v1337 = vpack.c.b16 %v1112, %v1103
        %v1338 = vpack.c.b16 %v1122, %v1113
        %v1339 = vpack.c.b16 %v1123, %v1114
        %v1340 = vpack.c.b16 %v1124, %v1115
        %v1341 = vpack.c.b16 %v1125, %v1116
        %v1342 = vpack.c.b16 %v1126, %v1117
        %v1343 = vpack.c.b16 %v1127, %v1118
        %v1344 = vpack.c.b16 %v1128, %v1119
        %v1345 = vpack.c.b16 %v1129, %v1120
        %v1346 = vpack.c.b16 %v1130, %v1121
        %v1347 = vpack.c.b16 %v1140, %v1131
        %v1348 = vpack.c.b16 %v1141, %v1132
        %v1349 = vpack.c.b16 %v1142, %v1133
        %v1350 = vpack.c.b16 %v1143, %v1134
        %v1351 = vpack.c.b16 %v1144, %v1135
        %v1352 = vpack.c.b16 %v1145, %v1136
        %v1353 = vpack.c.b16 %v1146, %v1137
        %v1354 = vpack.c.b16 %v1147, %v1138
        %v1355 = vpack.c.b16 %v1148, %v1139
        %v1356 = vpack.c.b16 %v1158, %v1149
        %v1357 = vpack.c.b16 %v1159, %v1150
        %v1358 = vpack.c.b16 %v1160, %v1151
        %v1359 = vpack.c.b16 %v1161, %v1152
        %v1360 = vpack.c.b16 %v1162, %v1153
        %v1361 = vpack.c.b16 %v1163, %v1154
        %v1362 = vpack.c.b16 %v1164, %v1155
        %v1363 = vpack.c.b16 %v1165, %v1156
        %v1364 = vpack.c.b16 %v1166, %v1157
        %v1365 = vpack.c.b16 %v1167, %v1167
        %v1366 = vpack.c.b16 %v1168, %v1168
        %v1367 = vpack.c.b16 %v1169, %v1169
        %v1368 = vpack.c.b16 %v1170, %v1170
        %v1369 = vpack.c.b16 %v1171, %v1171
        %v1370 = vpack.c.b16 %v1172, %v1172
        %v1371 = vpack.c.b16 %v1173, %v1173
        %v1372 = vpack.c.b16 %v1174, %v1174
        %v1373 = vpack.c.b16 %v1175, %v1175
        %vm1563 = vcmask 719872
        %v1565 = vsel %vm1563, %v556, 0
        %v1568 = vsel %vm1563, %v559, 0
        %v1571 = vsel %vm1563, %v562, 0
        %v1574 = vsel %vm1563, %v565, 0
        %vm1576 = vcmask 1043456
        %v1578 = vsel %vm1576, %v1365, 0
        %v1581 = vsel %vm1576, %v1366, 0
        %v1584 = vsel %vm1576, %v1367, 0
        %v1587 = vsel %vm1576, %v1368, 0
        %v1590 = vsel %vm1576, %v1369, 0
        %v1593 = vsel %vm1576, %v1370, 0
        %v1596 = vsel %vm1576, %v1371, 0
        %v1599 = vsel %vm1576, %v1372, 0
        %v1602 = vsel %vm1576, %v1373, 0
        %1604 = vmatprep.subr.bf16.mxu0 %v1177
        %1605 = vmatpush1.bf16.msra.mxu0 %v1176
        %1606 = vmatprep.subr.bf16.mxu0 %v1186
        %1607 = vmatpush1.bf16.msra.mxu0 %v1185
        %1608 = vmatprep.subr.bf16.mxu0 %v1195
        %1609 = vmatpush1.bf16.msra.mxu0 %v1194
        %1610 = vmatprep.subr.bf16.mxu0 %v1204
        %1611 = vmatpush1.bf16.msra.mxu0 %v1203
        %1612 = vmatprep.subr.bf16.mxu0 %v1213
        %1613 = vmatpush1.bf16.msra.mxu0 %v1212
        %1614 = vmatprep.subr.bf16.mxu0 %v1222
        %1615 = vmatpush1.bf16.msra.mxu0 %v1221
        %1616 = vmatprep.subr.bf16.mxu0 %v1231
        %1617 = vmatpush1.bf16.msra.mxu0 %v1230
        %1618 = vmatprep.subr.bf16.mxu0 %v1240
        %1619 = vmatpush1.bf16.msra.mxu0 %v1239
        %1620 = vmatprep.subr.bf16.mxu0 %v1249
        %1621 = vmatpush1.bf16.msra.mxu0 %v1248
        %1622 = vmatprep.subr.bf16.mxu0 %v1258
        %1623 = vmatpush1.bf16.msra.mxu0 %v1257
        %1624 = vmatprep.subr.bf16.mxu0 %v1267
        %1625 = vmatpush1.bf16.msra.mxu0 %v1266
        %1626 = vmatprep.subr.bf16.mxu0 %v1276
        %1627 = vmatpush1.bf16.msra.mxu0 %v1275
        %1628 = vmatprep.subr.bf16.mxu0 %v1285
        %1629 = vmatpush1.bf16.msra.mxu0 %v1284
        %1630 = vmatprep.subr.bf16.mxu0 %v1294
        %1631 = vmatpush1.bf16.msra.mxu0 %v1293
        %1632 = vmatprep.subr.bf16.mxu0 %v1303
        %1633 = vmatpush1.bf16.msra.mxu0 %v1302
        %1634 = vmatprep.subr.bf16.mxu0 %v1312
        %1635 = vmatpush1.bf16.msra.mxu0 %v1311
        %1636 = vmatprep.mubr.bf16.mxu0 %v555
        %1637 = vmatmul.mubr.bf16.gmra.mrb[0].mxu0 %v554
        %v1638 = vpop.f32.mrb[0].mxu0
        %v1639 = vadd.f32 0.0, %v1638
        %v1640 = vpop.f32.mrb[0].mxu0
        %v1641 = vadd.f32 0.0, %v1640
        %v1642 = vpop.f32.mrb[0].mxu0
        %v1643 = vadd.f32 0.0, %v1642
        %v1644 = vpop.f32.mrb[0].mxu0
        %v1645 = vadd.f32 0.0, %v1644
        %1646 = vmatprep.mubr.bf16.mxu0 %v558
        %1647 = vmatmul.mubr.bf16.gmra.mrb[0].mxu0 %v557
        %v1648 = vpop.f32.mrb[0].mxu0
        %v1649 = vadd.f32 0.0, %v1648
        %v1650 = vpop.f32.mrb[0].mxu0
        %v1651 = vadd.f32 0.0, %v1650
        %v1652 = vpop.f32.mrb[0].mxu0
        %v1653 = vadd.f32 0.0, %v1652
        %v1654 = vpop.f32.mrb[0].mxu0
        %v1655 = vadd.f32 0.0, %v1654
        %1656 = vmatprep.mubr.bf16.mxu0 %v561
        %1657 = vmatmul.mubr.bf16.gmra.mrb[0].mxu0 %v560
        %v1658 = vpop.f32.mrb[0].mxu0
        %v1659 = vadd.f32 0.0, %v1658
        %v1660 = vpop.f32.mrb[0].mxu0
        %v1661 = vadd.f32 0.0, %v1660
        %v1662 = vpop.f32.mrb[0].mxu0
        %v1663 = vadd.f32 0.0, %v1662
        %v1664 = vpop.f32.mrb[0].mxu0
        %v1665 = vadd.f32 0.0, %v1664
        %1666 = vmatprep.mubr.bf16.mxu0 %v564
        %1667 = vmatmul.mubr.bf16.gmra.mrb[0].mxu0 %v563
        %v1668 = vpop.f32.mrb[0].mxu0
        %v1669 = vadd.f32 0.0, %v1668
        %v1670 = vpop.f32.mrb[0].mxu0
        %v1671 = vadd.f32 0.0, %v1670
        %v1672 = vpop.f32.mrb[0].mxu0
        %v1673 = vpop.f32.mrb[0].mxu0
        %1674 = vdwg.mxu0
        %1675 = vmatprep.subr.bf16.mxu0 %v1321
        %1676 = vmatpush1.bf16.msra.mxu0 %v1320
        %1677 = vmatprep.subr.bf16.mxu0 %v1330
        %1678 = vmatpush1.bf16.msra.mxu0 %v1329
        %1679 = vmatprep.subr.bf16.mxu0 %v1339
        %1680 = vmatpush1.bf16.msra.mxu0 %v1338
        %1681 = vmatprep.subr.bf16.mxu0 %v1348
        %1682 = vmatpush1.bf16.msra.mxu0 %v1347
        %1683 = vmatprep.subr.bf16.mxu0 %v1357
        %1684 = vmatpush1.bf16.msra.mxu0 %v1356
        %1685 = vmatprep.subr.bf16.mxu0 %v1581
        %1686 = vmatpush1.bf16.msra.mxu0 %v1578
        %1687 = vmatprep.subr.bf16.mxu0 0
        %1688 = vmatpush1.bf16.msra.mxu0 0
        %1689 = vmatprep.subr.bf16.mxu0 0
        %1690 = vmatpush1.bf16.msra.mxu0 0
        %1691 = vmatprep.subr.bf16.mxu0 0
        %1692 = vmatpush1.bf16.msra.mxu0 0
        %1693 = vmatprep.subr.bf16.mxu0 0
        %1694 = vmatpush1.bf16.msra.mxu0 0
        %1695 = vmatprep.subr.bf16.mxu0 0
        %1696 = vmatpush1.bf16.msra.mxu0 0
        %1697 = vmatprep.subr.bf16.mxu0 0
        %1698 = vmatpush1.bf16.msra.mxu0 0
        %1699 = vmatprep.subr.bf16.mxu0 0
        %1700 = vmatpush1.bf16.msra.mxu0 0
        %1701 = vmatprep.subr.bf16.mxu0 0
        %1702 = vmatpush1.bf16.msra.mxu0 0
        %1703 = vmatprep.subr.bf16.mxu0 0
        %1704 = vmatpush1.bf16.msra.mxu0 0
        %1705 = vmatprep.subr.bf16.mxu0 0
        %1706 = vmatpush1.bf16.msra.mxu0 0
        %1707 = vmatprep.mubr.bf16.mxu0 0
        %1708 = vmatmul.mubr.bf16.gmra.mrb[0].mxu0 %v1565
        %v1709 = vpop.f32.mrb[0].mxu0
        %v1710 = vadd.f32 %v1639, %v1709
        %v1711 = vpop.f32.mrb[0].mxu0
        %v1712 = vadd.f32 %v1641, %v1711
        %v1713 = vpop.f32.mrb[0].mxu0
        %v1714 = vadd.f32 %v1643, %v1713
        %v1715 = vpop.f32.mrb[0].mxu0
        %v1716 = vadd.f32 %v1645, %v1715
        %1717 = vmatprep.mubr.bf16.mxu0 0
        %1718 = vmatmul.mubr.bf16.gmra.mrb[0].mxu0 %v1568
        %v1719 = vpop.f32.mrb[0].mxu0
        %v1720 = vadd.f32 %v1649, %v1719
        %v1721 = vpop.f32.mrb[0].mxu0
        %v1722 = vadd.f32 %v1651, %v1721
        %v1723 = vpop.f32.mrb[0].mxu0
        %v1724 = vadd.f32 %v1653, %v1723
        %v1725 = vpop.f32.mrb[0].mxu0
        %v1726 = vadd.f32 %v1655, %v1725
        %1727 = vmatprep.mubr.bf16.mxu0 0
        %1728 = vmatmul.mubr.bf16.gmra.mrb[0].mxu0 %v1571
        %v1729 = vpop.f32.mrb[0].mxu0
        %v1730 = vadd.f32 %v1659, %v1729
        %v1731 = vpop.f32.mrb[0].mxu0
        %v1732 = vadd.f32 %v1661, %v1731
        %v1733 = vpop.f32.mrb[0].mxu0
        %v1734 = vadd.f32 %v1663, %v1733
        %v1735 = vpop.f32.mrb[0].mxu0
        %v1736 = vadd.f32 %v1665, %v1735
        %1737 = vmatprep.mubr.bf16.mxu0 0
        %1738 = vmatmul.mubr.bf16.gmra.mrb[0].mxu0 %v1574
        %v1739 = vpop.f32.mrb[0].mxu0
        %v1740 = vadd.f32 %v1669, %v1739
        %v1741 = vpop.f32.mrb[0].mxu0
        %v1742 = vadd.f32 %v1671, %v1741
        %v1743 = vpop.f32.mrb[0].mxu0
        %v1744 = vpop.f32.mrb[0].mxu0
        %1745 = vdwg.mxu0
        %1746 = vmatprep.subr.bf16.mxu0 %v1179
        %1747 = vmatpush1.bf16.msra.mxu0 %v1178
        %1748 = vmatprep.subr.bf16.mxu0 %v1188
        %1749 = vmatpush1.bf16.msra.mxu0 %v1187
        %1750 = vmatprep.subr.bf16.mxu0 %v1197
        %1751 = vmatpush1.bf16.msra.mxu0 %v1196
        %1752 = vmatprep.subr.bf16.mxu0 %v1206
        %1753 = vmatpush1.bf16.msra.mxu0 %v1205
        %1754 = vmatprep.subr.bf16.mxu0 %v1215
        %1755 = vmatpush1.bf16.msra.mxu0 %v1214
        %1756 = vmatprep.subr.bf16.mxu0 %v1224
        %1757 = vmatpush1.bf16.msra.mxu0 %v1223
        %1758 = vmatprep.subr.bf16.mxu0 %v1233
        %1759 = vmatpush1.bf16.msra.mxu0 %v1232
        %1760 = vmatprep.subr.bf16.mxu0 %v1242
        %1761 = vmatpush1.bf16.msra.mxu0 %v1241
        %1762 = vmatprep.subr.bf16.mxu0 %v1251
        %1763 = vmatpush1.bf16.msra.mxu0 %v1250
        %1764 = vmatprep.subr.bf16.mxu0 %v1260
        %1765 = vmatpush1.bf16.msra.mxu0 %v1259
        %1766 = vmatprep.subr.bf16.mxu0 %v1269
        %1767 = vmatpush1.bf16.msra.mxu0 %v1268
        %1768 = vmatprep.subr.bf16.mxu0 %v1278
        %1769 = vmatpush1.bf16.msra.mxu0 %v1277
        %1770 = vmatprep.subr.bf16.mxu0 %v1287
        %1771 = vmatpush1.bf16.msra.mxu0 %v1286
        %1772 = vmatprep.subr.bf16.mxu0 %v1296
        %1773 = vmatpush1.bf16.msra.mxu0 %v1295
        %1774 = vmatprep.subr.bf16.mxu0 %v1305
        %1775 = vmatpush1.bf16.msra.mxu0 %v1304
        %1776 = vmatprep.subr.bf16.mxu0 %v1314
        %1777 = vmatpush1.bf16.msra.mxu0 %v1313
        %1778 = vmatprep.mubr.bf16.mxu0 %v555
        %1779 = vmatmul.mubr.bf16.gmra.mrb[0].mxu0 %v554
        %v1780 = vpop.f32.mrb[0].mxu0
        %v1781 = vadd.f32 0.0, %v1780
        %v1782 = vpop.f32.mrb[0].mxu0
        %v1783 = vadd.f32 0.0, %v1782
        %v1784 = vpop.f32.mrb[0].mxu0
        %v1785 = vadd.f32 0.0, %v1784
        %v1786 = vpop.f32.mrb[0].mxu0
        %v1787 = vadd.f32 0.0, %v1786
        %1788 = vmatprep.mubr.bf16.mxu0 %v558
        %1789 = vmatmul.mubr.bf16.gmra.mrb[0].mxu0 %v557
        %v1790 = vpop.f32.mrb[0].mxu0
        %v1791 = vadd.f32 0.0, %v1790
        %v1792 = vpop.f32.mrb[0].mxu0
        %v1793 = vadd.f32 0.0, %v1792
        %v1794 = vpop.f32.mrb[0].mxu0
        %v1795 = vadd.f32 0.0, %v1794
        %v1796 = vpop.f32.mrb[0].mxu0
        %v1797 = vadd.f32 0.0, %v1796
        %1798 = vmatprep.mubr.bf16.mxu0 %v561
        %1799 = vmatmul.mubr.bf16.gmra.mrb[0].mxu0 %v560
        %v1800 = vpop.f32.mrb[0].mxu0
        %v1801 = vadd.f32 0.0, %v1800
        %v1802 = vpop.f32.mrb[0].mxu0
        %v1803 = vadd.f32 0.0, %v1802
        %v1804 = vpop.f32.mrb[0].mxu0
        %v1805 = vadd.f32 0.0, %v1804
        %v1806 = vpop.f32.mrb[0].mxu0
        %v1807 = vadd.f32 0.0, %v1806
        %1808 = vmatprep.mubr.bf16.mxu0 %v564
        %1809 = vmatmul.mubr.bf16.gmra.mrb[0].mxu0 %v563
        %v1810 = vpop.f32.mrb[0].mxu0
        %v1811 = vadd.f32 0.0, %v1810
        %v1812 = vpop.f32.mrb[0].mxu0
        %v1813 = vadd.f32 0.0, %v1812
        %v1814 = vpop.f32.mrb[0].mxu0
        %v1815 = vpop.f32.mrb[0].mxu0
        %1816 = vdwg.mxu0
        %1817 = vmatprep.subr.bf16.mxu0 %v1323
        %1818 = vmatpush1.bf16.msra.mxu0 %v1322
        %1819 = vmatprep.subr.bf16.mxu0 %v1332
        %1820 = vmatpush1.bf16.msra.mxu0 %v1331
        %1821 = vmatprep.subr.bf16.mxu0 %v1341
        %1822 = vmatpush1.bf16.msra.mxu0 %v1340
        %1823 = vmatprep.subr.bf16.mxu0 %v1350
        %1824 = vmatpush1.bf16.msra.mxu0 %v1349
        %1825 = vmatprep.subr.bf16.mxu0 %v1359
        %1826 = vmatpush1.bf16.msra.mxu0 %v1358
        %1827 = vmatprep.subr.bf16.mxu0 %v1587
        %1828 = vmatpush1.bf16.msra.mxu0 %v1584
        %1829 = vmatprep.subr.bf16.mxu0 0
        %1830 = vmatpush1.bf16.msra.mxu0 0
        %1831 = vmatprep.subr.bf16.mxu0 0
        %1832 = vmatpush1.bf16.msra.mxu0 0
        %1833 = vmatprep.subr.bf16.mxu0 0
        %1834 = vmatpush1.bf16.msra.mxu0 0
        %1835 = vmatprep.subr.bf16.mxu0 0
        %1836 = vmatpush1.bf16.msra.mxu0 0
        %1837 = vmatprep.subr.bf16.mxu0 0
        %1838 = vmatpush1.bf16.msra.mxu0 0
        %1839 = vmatprep.subr.bf16.mxu0 0
        %1840 = vmatpush1.bf16.msra.mxu0 0
        %1841 = vmatprep.subr.bf16.mxu0 0
        %1842 = vmatpush1.bf16.msra.mxu0 0
        %1843 = vmatprep.subr.bf16.mxu0 0
        %1844 = vmatpush1.bf16.msra.mxu0 0
        %1845 = vmatprep.subr.bf16.mxu0 0
        %1846 = vmatpush1.bf16.msra.mxu0 0
        %1847 = vmatprep.subr.bf16.mxu0 0
        %1848 = vmatpush1.bf16.msra.mxu0 0
        %1849 = vmatprep.mubr.bf16.mxu0 0
        %1850 = vmatmul.mubr.bf16.gmra.mrb[0].mxu0 %v1565
        %v1851 = vpop.f32.mrb[0].mxu0
        %v1852 = vadd.f32 %v1781, %v1851
        %v1853 = vpop.f32.mrb[0].mxu0
        %v1854 = vadd.f32 %v1783, %v1853
        %v1855 = vpop.f32.mrb[0].mxu0
        %v1856 = vadd.f32 %v1785, %v1855
        %v1857 = vpop.f32.mrb[0].mxu0
        %v1858 = vadd.f32 %v1787, %v1857
        %1859 = vmatprep.mubr.bf16.mxu0 0
        %1860 = vmatmul.mubr.bf16.gmra.mrb[0].mxu0 %v1568
        %v1861 = vpop.f32.mrb[0].mxu0
        %v1862 = vadd.f32 %v1791, %v1861
        %v1863 = vpop.f32.mrb[0].mxu0
        %v1864 = vadd.f32 %v1793, %v1863
        %v1865 = vpop.f32.mrb[0].mxu0
        %v1866 = vadd.f32 %v1795, %v1865
        %v1867 = vpop.f32.mrb[0].mxu0
        %v1868 = vadd.f32 %v1797, %v1867
        %1869 = vmatprep.mubr.bf16.mxu0 0
        %1870 = vmatmul.mubr.bf16.gmra.mrb[0].mxu0 %v1571
        %v1871 = vpop.f32.mrb[0].mxu0
        %v1872 = vadd.f32 %v1801, %v1871
        %v1873 = vpop.f32.mrb[0].mxu0
        %v1874 = vadd.f32 %v1803, %v1873
        %v1875 = vpop.f32.mrb[0].mxu0
        %v1876 = vadd.f32 %v1805, %v1875
        %v1877 = vpop.f32.mrb[0].mxu0
        %v1878 = vadd.f32 %v1807, %v1877
        %1879 = vmatprep.mubr.bf16.mxu0 0
        %1880 = vmatmul.mubr.bf16.gmra.mrb[0].mxu0 %v1574
        %v1881 = vpop.f32.mrb[0].mxu0
        %v1882 = vadd.f32 %v1811, %v1881
        %v1883 = vpop.f32.mrb[0].mxu0
        %v1884 = vadd.f32 %v1813, %v1883
        %v1885 = vpop.f32.mrb[0].mxu0
        %v1886 = vpop.f32.mrb[0].mxu0
        %1887 = vdwg.mxu0
        %1888 = vmatprep.subr.bf16.mxu0 %v1181
        %1889 = vmatpush1.bf16.msra.mxu0 %v1180
        %1890 = vmatprep.subr.bf16.mxu0 %v1190
        %1891 = vmatpush1.bf16.msra.mxu0 %v1189
        %1892 = vmatprep.subr.bf16.mxu0 %v1199
        %1893 = vmatpush1.bf16.msra.mxu0 %v1198
        %1894 = vmatprep.subr.bf16.mxu0 %v1208
        %1895 = vmatpush1.bf16.msra.mxu0 %v1207
        %1896 = vmatprep.subr.bf16.mxu0 %v1217
        %1897 = vmatpush1.bf16.msra.mxu0 %v1216
        %1898 = vmatprep.subr.bf16.mxu0 %v1226
        %1899 = vmatpush1.bf16.msra.mxu0 %v1225
        %1900 = vmatprep.subr.bf16.mxu0 %v1235
        %1901 = vmatpush1.bf16.msra.mxu0 %v1234
        %1902 = vmatprep.subr.bf16.mxu0 %v1244
        %1903 = vmatpush1.bf16.msra.mxu0 %v1243
        %1904 = vmatprep.subr.bf16.mxu0 %v1253
        %1905 = vmatpush1.bf16.msra.mxu0 %v1252
        %1906 = vmatprep.subr.bf16.mxu0 %v1262
        %1907 = vmatpush1.bf16.msra.mxu0 %v1261
        %1908 = vmatprep.subr.bf16.mxu0 %v1271
        %1909 = vmatpush1.bf16.msra.mxu0 %v1270
        %1910 = vmatprep.subr.bf16.mxu0 %v1280
        %1911 = vmatpush1.bf16.msra.mxu0 %v1279
        %1912 = vmatprep.subr.bf16.mxu0 %v1289
        %1913 = vmatpush1.bf16.msra.mxu0 %v1288
        %1914 = vmatprep.subr.bf16.mxu0 %v1298
        %1915 = vmatpush1.bf16.msra.mxu0 %v1297
        %1916 = vmatprep.subr.bf16.mxu0 %v1307
        %1917 = vmatpush1.bf16.msra.mxu0 %v1306
        %1918 = vmatprep.subr.bf16.mxu0 %v1316
        %1919 = vmatpush1.bf16.msra.mxu0 %v1315
        %1920 = vmatprep.mubr.bf16.mxu0 %v555
        %1921 = vmatmul.mubr.bf16.gmra.mrb[0].mxu0 %v554
        %v1922 = vpop.f32.mrb[0].mxu0
        %v1923 = vadd.f32 0.0, %v1922
        %v1924 = vpop.f32.mrb[0].mxu0
        %v1925 = vadd.f32 0.0, %v1924
        %v1926 = vpop.f32.mrb[0].mxu0
        %v1927 = vadd.f32 0.0, %v1926
        %v1928 = vpop.f32.mrb[0].mxu0
        %v1929 = vadd.f32 0.0, %v1928
        %1930 = vmatprep.mubr.bf16.mxu0 %v558
        %1931 = vmatmul.mubr.bf16.gmra.mrb[0].mxu0 %v557
        %v1932 = vpop.f32.mrb[0].mxu0
        %v1933 = vadd.f32 0.0, %v1932
        %v1934 = vpop.f32.mrb[0].mxu0
        %v1935 = vadd.f32 0.0, %v1934
        %v1936 = vpop.f32.mrb[0].mxu0
        %v1937 = vadd.f32 0.0, %v1936
        %v1938 = vpop.f32.mrb[0].mxu0
        %v1939 = vadd.f32 0.0, %v1938
        %1940 = vmatprep.mubr.bf16.mxu0 %v561
        %1941 = vmatmul.mubr.bf16.gmra.mrb[0].mxu0 %v560
        %v1942 = vpop.f32.mrb[0].mxu0
        %v1943 = vadd.f32 0.0, %v1942
        %v1944 = vpop.f32.mrb[0].mxu0
        %v1945 = vadd.f32 0.0, %v1944
        %v1946 = vpop.f32.mrb[0].mxu0
        %v1947 = vadd.f32 0.0, %v1946
        %v1948 = vpop.f32.mrb[0].mxu0
        %v1949 = vadd.f32 0.0, %v1948
        %1950 = vmatprep.mubr.bf16.mxu0 %v564
        %1951 = vmatmul.mubr.bf16.gmra.mrb[0].mxu0 %v563
        %v1952 = vpop.f32.mrb[0].mxu0
        %v1953 = vadd.f32 0.0, %v1952
        %v1954 = vpop.f32.mrb[0].mxu0
        %v1955 = vadd.f32 0.0, %v1954
        %v1956 = vpop.f32.mrb[0].mxu0
        %v1957 = vpop.f32.mrb[0].mxu0
        %1958 = vdwg.mxu0
        %1959 = vmatprep.subr.bf16.mxu0 %v1325
        %1960 = vmatpush1.bf16.msra.mxu0 %v1324
        %1961 = vmatprep.subr.bf16.mxu0 %v1334
        %1962 = vmatpush1.bf16.msra.mxu0 %v1333
        %1963 = vmatprep.subr.bf16.mxu0 %v1343
        %1964 = vmatpush1.bf16.msra.mxu0 %v1342
        %1965 = vmatprep.subr.bf16.mxu0 %v1352
        %1966 = vmatpush1.bf16.msra.mxu0 %v1351
        %1967 = vmatprep.subr.bf16.mxu0 %v1361
        %1968 = vmatpush1.bf16.msra.mxu0 %v1360
        %1969 = vmatprep.subr.bf16.mxu0 %v1593
        %1970 = vmatpush1.bf16.msra.mxu0 %v1590
        %1971 = vmatprep.subr.bf16.mxu0 0
        %1972 = vmatpush1.bf16.msra.mxu0 0
        %1973 = vmatprep.subr.bf16.mxu0 0
        %1974 = vmatpush1.bf16.msra.mxu0 0
        %1975 = vmatprep.subr.bf16.mxu0 0
        %1976 = vmatpush1.bf16.msra.mxu0 0
        %1977 = vmatprep.subr.bf16.mxu0 0
        %1978 = vmatpush1.bf16.msra.mxu0 0
        %1979 = vmatprep.subr.bf16.mxu0 0
        %1980 = vmatpush1.bf16.msra.mxu0 0
        %1981 = vmatprep.subr.bf16.mxu0 0
        %1982 = vmatpush1.bf16.msra.mxu0 0
        %1983 = vmatprep.subr.bf16.mxu0 0
        %1984 = vmatpush1.bf16.msra.mxu0 0
        %1985 = vmatprep.subr.bf16.mxu0 0
        %1986 = vmatpush1.bf16.msra.mxu0 0
        %1987 = vmatprep.subr.bf16.mxu0 0
        %1988 = vmatpush1.bf16.msra.mxu0 0
        %1989 = vmatprep.subr.bf16.mxu0 0
        %1990 = vmatpush1.bf16.msra.mxu0 0
        %1991 = vmatprep.mubr.bf16.mxu0 0
        %1992 = vmatmul.mubr.bf16.gmra.mrb[0].mxu0 %v1565
        %v1993 = vpop.f32.mrb[0].mxu0
        %v1994 = vadd.f32 %v1923, %v1993
        %v1995 = vpop.f32.mrb[0].mxu0
        %v1996 = vadd.f32 %v1925, %v1995
        %v1997 = vpop.f32.mrb[0].mxu0
        %v1998 = vadd.f32 %v1927, %v1997
        %v1999 = vpop.f32.mrb[0].mxu0
        %v2000 = vadd.f32 %v1929, %v1999
        %2001 = vmatprep.mubr.bf16.mxu0 0
        %2002 = vmatmul.mubr.bf16.gmra.mrb[0].mxu0 %v1568
        %v2003 = vpop.f32.mrb[0].mxu0
        %v2004 = vadd.f32 %v1933, %v2003
        %v2005 = vpop.f32.mrb[0].mxu0
        %v2006 = vadd.f32 %v1935, %v2005
        %v2007 = vpop.f32.mrb[0].mxu0
        %v2008 = vadd.f32 %v1937, %v2007
        %v2009 = vpop.f32.mrb[0].mxu0
        %v2010 = vadd.f32 %v1939, %v2009
        %2011 = vmatprep.mubr.bf16.mxu0 0
        %2012 = vmatmul.mubr.bf16.gmra.mrb[0].mxu0 %v1571
        %v2013 = vpop.f32.mrb[0].mxu0
        %v2014 = vadd.f32 %v1943, %v2013
        %v2015 = vpop.f32.mrb[0].mxu0
        %v2016 = vadd.f32 %v1945, %v2015
        %v2017 = vpop.f32.mrb[0].mxu0
        %v2018 = vadd.f32 %v1947, %v2017
        %v2019 = vpop.f32.mrb[0].mxu0
        %v2020 = vadd.f32 %v1949, %v2019
        %2021 = vmatprep.mubr.bf16.mxu0 0
        %2022 = vmatmul.mubr.bf16.gmra.mrb[0].mxu0 %v1574
        %v2023 = vpop.f32.mrb[0].mxu0
        %v2024 = vadd.f32 %v1953, %v2023
        %v2025 = vpop.f32.mrb[0].mxu0
        %v2026 = vadd.f32 %v1955, %v2025
        %v2027 = vpop.f32.mrb[0].mxu0
        %v2028 = vpop.f32.mrb[0].mxu0
        %2029 = vdwg.mxu0
        %2030 = vmatprep.subr.bf16.mxu0 %v1183
        %2031 = vmatpush1.bf16.msra.mxu0 %v1182
        %2032 = vmatprep.subr.bf16.mxu0 %v1192
        %2033 = vmatpush1.bf16.msra.mxu0 %v1191
        %2034 = vmatprep.subr.bf16.mxu0 %v1201
        %2035 = vmatpush1.bf16.msra.mxu0 %v1200
        %2036 = vmatprep.subr.bf16.mxu0 %v1210
        %2037 = vmatpush1.bf16.msra.mxu0 %v1209
        %2038 = vmatprep.subr.bf16.mxu0 %v1219
        %2039 = vmatpush1.bf16.msra.mxu0 %v1218
        %2040 = vmatprep.subr.bf16.mxu0 %v1228
        %2041 = vmatpush1.bf16.msra.mxu0 %v1227
        %2042 = vmatprep.subr.bf16.mxu0 %v1237
        %2043 = vmatpush1.bf16.msra.mxu0 %v1236
        %2044 = vmatprep.subr.bf16.mxu0 %v1246
        %2045 = vmatpush1.bf16.msra.mxu0 %v1245
        %2046 = vmatprep.subr.bf16.mxu0 %v1255
        %2047 = vmatpush1.bf16.msra.mxu0 %v1254
        %2048 = vmatprep.subr.bf16.mxu0 %v1264
        %2049 = vmatpush1.bf16.msra.mxu0 %v1263
        %2050 = vmatprep.subr.bf16.mxu0 %v1273
        %2051 = vmatpush1.bf16.msra.mxu0 %v1272
        %2052 = vmatprep.subr.bf16.mxu0 %v1282
        %2053 = vmatpush1.bf16.msra.mxu0 %v1281
        %2054 = vmatprep.subr.bf16.mxu0 %v1291
        %2055 = vmatpush1.bf16.msra.mxu0 %v1290
        %2056 = vmatprep.subr.bf16.mxu0 %v1300
        %2057 = vmatpush1.bf16.msra.mxu0 %v1299
        %2058 = vmatprep.subr.bf16.mxu0 %v1309
        %2059 = vmatpush1.bf16.msra.mxu0 %v1308
        %2060 = vmatprep.subr.bf16.mxu0 %v1318
        %2061 = vmatpush1.bf16.msra.mxu0 %v1317
        %2062 = vmatprep.mubr.bf16.mxu0 %v555
        %2063 = vmatmul.mubr.bf16.gmra.mrb[0].mxu0 %v554
        %v2064 = vpop.f32.mrb[0].mxu0
        %v2065 = vadd.f32 0.0, %v2064
        %v2066 = vpop.f32.mrb[0].mxu0
        %v2067 = vadd.f32 0.0, %v2066
        %v2068 = vpop.f32.mrb[0].mxu0
        %v2069 = vadd.f32 0.0, %v2068
        %v2070 = vpop.f32.mrb[0].mxu0
        %v2071 = vadd.f32 0.0, %v2070
        %2072 = vmatprep.mubr.bf16.mxu0 %v558
        %2073 = vmatmul.mubr.bf16.gmra.mrb[0].mxu0 %v557
        %v2074 = vpop.f32.mrb[0].mxu0
        %v2075 = vadd.f32 0.0, %v2074
        %v2076 = vpop.f32.mrb[0].mxu0
        %v2077 = vadd.f32 0.0, %v2076
        %v2078 = vpop.f32.mrb[0].mxu0
        %v2079 = vadd.f32 0.0, %v2078
        %v2080 = vpop.f32.mrb[0].mxu0
        %v2081 = vadd.f32 0.0, %v2080
        %2082 = vmatprep.mubr.bf16.mxu0 %v561
        %2083 = vmatmul.mubr.bf16.gmra.mrb[0].mxu0 %v560
        %v2084 = vpop.f32.mrb[0].mxu0
        %v2085 = vadd.f32 0.0, %v2084
        %v2086 = vpop.f32.mrb[0].mxu0
        %v2087 = vadd.f32 0.0, %v2086
        %v2088 = vpop.f32.mrb[0].mxu0
        %v2089 = vadd.f32 0.0, %v2088
        %v2090 = vpop.f32.mrb[0].mxu0
        %v2091 = vadd.f32 0.0, %v2090
        %2092 = vmatprep.mubr.bf16.mxu0 %v564
        %2093 = vmatmul.mubr.bf16.gmra.mrb[0].mxu0 %v563
        %v2094 = vpop.f32.mrb[0].mxu0
        %v2095 = vadd.f32 0.0, %v2094
        %v2096 = vpop.f32.mrb[0].mxu0
        %v2097 = vadd.f32 0.0, %v2096
        %v2098 = vpop.f32.mrb[0].mxu0
        %v2099 = vpop.f32.mrb[0].mxu0
        %2100 = vdwg.mxu0
        %2101 = vmatprep.subr.bf16.mxu0 %v1327
        %2102 = vmatpush1.bf16.msra.mxu0 %v1326
        %2103 = vmatprep.subr.bf16.mxu0 %v1336
        %2104 = vmatpush1.bf16.msra.mxu0 %v1335
        %2105 = vmatprep.subr.bf16.mxu0 %v1345
        %2106 = vmatpush1.bf16.msra.mxu0 %v1344
        %2107 = vmatprep.subr.bf16.mxu0 %v1354
        %2108 = vmatpush1.bf16.msra.mxu0 %v1353
        %2109 = vmatprep.subr.bf16.mxu0 %v1363
        %2110 = vmatpush1.bf16.msra.mxu0 %v1362
        %2111 = vmatprep.subr.bf16.mxu0 %v1599
        %2112 = vmatpush1.bf16.msra.mxu0 %v1596
        %2113 = vmatprep.subr.bf16.mxu0 0
        %2114 = vmatpush1.bf16.msra.mxu0 0
        %2115 = vmatprep.subr.bf16.mxu0 0
        %2116 = vmatpush1.bf16.msra.mxu0 0
        %2117 = vmatprep.subr.bf16.mxu0 0
        %2118 = vmatpush1.bf16.msra.mxu0 0
        %2119 = vmatprep.subr.bf16.mxu0 0
        %2120 = vmatpush1.bf16.msra.mxu0 0
        %2121 = vmatprep.subr.bf16.mxu0 0
        %2122 = vmatpush1.bf16.msra.mxu0 0
        %2123 = vmatprep.subr.bf16.mxu0 0
        %2124 = vmatpush1.bf16.msra.mxu0 0
        %2125 = vmatprep.subr.bf16.mxu0 0
        %2126 = vmatpush1.bf16.msra.mxu0 0
        %2127 = vmatprep.subr.bf16.mxu0 0
        %2128 = vmatpush1.bf16.msra.mxu0 0
        %2129 = vmatprep.subr.bf16.mxu0 0
        %2130 = vmatpush1.bf16.msra.mxu0 0
        %2131 = vmatprep.subr.bf16.mxu0 0
        %2132 = vmatpush1.bf16.msra.mxu0 0
        %2133 = vmatprep.mubr.bf16.mxu0 0
        %2134 = vmatmul.mubr.bf16.gmra.mrb[0].mxu0 %v1565
        %v2135 = vpop.f32.mrb[0].mxu0
        %v2136 = vadd.f32 %v2065, %v2135
        %v2137 = vpop.f32.mrb[0].mxu0
        %v2138 = vadd.f32 %v2067, %v2137
        %v2139 = vpop.f32.mrb[0].mxu0
        %v2140 = vadd.f32 %v2069, %v2139
        %v2141 = vpop.f32.mrb[0].mxu0
        %v2142 = vadd.f32 %v2071, %v2141
        %2143 = vmatprep.mubr.bf16.mxu0 0
        %2144 = vmatmul.mubr.bf16.gmra.mrb[0].mxu0 %v1568
        %v2145 = vpop.f32.mrb[0].mxu0
        %v2146 = vadd.f32 %v2075, %v2145
        %v2147 = vpop.f32.mrb[0].mxu0
        %v2148 = vadd.f32 %v2077, %v2147
        %v2149 = vpop.f32.mrb[0].mxu0
        %v2150 = vadd.f32 %v2079, %v2149
        %v2151 = vpop.f32.mrb[0].mxu0
        %v2152 = vadd.f32 %v2081, %v2151
        %2153 = vmatprep.mubr.bf16.mxu0 0
        %2154 = vmatmul.mubr.bf16.gmra.mrb[0].mxu0 %v1571
        %v2155 = vpop.f32.mrb[0].mxu0
        %v2156 = vadd.f32 %v2085, %v2155
        %v2157 = vpop.f32.mrb[0].mxu0
        %v2158 = vadd.f32 %v2087, %v2157
        %v2159 = vpop.f32.mrb[0].mxu0
        %v2160 = vadd.f32 %v2089, %v2159
        %v2161 = vpop.f32.mrb[0].mxu0
        %v2162 = vadd.f32 %v2091, %v2161
        %2163 = vmatprep.mubr.bf16.mxu0 0
        %2164 = vmatmul.mubr.bf16.gmra.mrb[0].mxu0 %v1574
        %v2165 = vpop.f32.mrb[0].mxu0
        %v2166 = vadd.f32 %v2095, %v2165
        %v2167 = vpop.f32.mrb[0].mxu0
        %v2168 = vadd.f32 %v2097, %v2167
        %v2169 = vpop.f32.mrb[0].mxu0
        %v2170 = vpop.f32.mrb[0].mxu0
        %2171 = vdwg.mxu0
        %2172 = vmatprep.subr.bf16.mxu0 0
        %2173 = vmatpush1.bf16.msra.mxu0 %v1184
        %2174 = vmatprep.subr.bf16.mxu0 0
        %2175 = vmatpush1.bf16.msra.mxu0 %v1193
        %2176 = vmatprep.subr.bf16.mxu0 0
        %2177 = vmatpush1.bf16.msra.mxu0 %v1202
        %2178 = vmatprep.subr.bf16.mxu0 0
        %2179 = vmatpush1.bf16.msra.mxu0 %v1211
        %2180 = vmatprep.subr.bf16.mxu0 0
        %2181 = vmatpush1.bf16.msra.mxu0 %v1220
        %2182 = vmatprep.subr.bf16.mxu0 0
        %2183 = vmatpush1.bf16.msra.mxu0 %v1229
        %2184 = vmatprep.subr.bf16.mxu0 0
        %2185 = vmatpush1.bf16.msra.mxu0 %v1238
        %2186 = vmatprep.subr.bf16.mxu0 0
        %2187 = vmatpush1.bf16.msra.mxu0 %v1247
        %2188 = vmatprep.subr.bf16.mxu0 0
        %2189 = vmatpush1.bf16.msra.mxu0 %v1256
        %2190 = vmatprep.subr.bf16.mxu0 0
        %2191 = vmatpush1.bf16.msra.mxu0 %v1265
        %2192 = vmatprep.subr.bf16.mxu0 0
        %2193 = vmatpush1.bf16.msra.mxu0 %v1274
        %2194 = vmatprep.subr.bf16.mxu0 0
        %2195 = vmatpush1.bf16.msra.mxu0 %v1283
        %2196 = vmatprep.subr.bf16.mxu0 0
        %2197 = vmatpush1.bf16.msra.mxu0 %v1292
        %2198 = vmatprep.subr.bf16.mxu0 0
        %2199 = vmatpush1.bf16.msra.mxu0 %v1301
        %2200 = vmatprep.subr.bf16.mxu0 0
        %2201 = vmatpush1.bf16.msra.mxu0 %v1310
        %2202 = vmatprep.subr.bf16.mxu0 0
        %2203 = vmatpush1.bf16.msra.mxu0 %v1319
        %2204 = vmatprep.mubr.bf16.mxu0 %v555
        %2205 = vmatmul.mubr.bf16.gmra.mrb[0].mxu0 %v554
        %v2206 = vpop.f32.mrb[0].mxu0
        %v2207 = vadd.f32 0.0, %v2206
        %v2208 = vpop.f32.mrb[0].mxu0
        %v2209 = vpop.f32.mrb[0].mxu0
        %v2210 = vadd.f32 0.0, %v2209
        %v2211 = vpop.f32.mrb[0].mxu0
        %2212 = vmatprep.mubr.bf16.mxu0 %v558
        %2213 = vmatmul.mubr.bf16.gmra.mrb[0].mxu0 %v557
        %v2214 = vpop.f32.mrb[0].mxu0
        %v2215 = vadd.f32 0.0, %v2214
        %v2216 = vpop.f32.mrb[0].mxu0
        %v2217 = vpop.f32.mrb[0].mxu0
        %v2218 = vadd.f32 0.0, %v2217
        %v2219 = vpop.f32.mrb[0].mxu0
        %2220 = vmatprep.mubr.bf16.mxu0 %v561
        %2221 = vmatmul.mubr.bf16.gmra.mrb[0].mxu0 %v560
        %v2222 = vpop.f32.mrb[0].mxu0
        %v2223 = vadd.f32 0.0, %v2222
        %v2224 = vpop.f32.mrb[0].mxu0
        %v2225 = vpop.f32.mrb[0].mxu0
        %v2226 = vadd.f32 0.0, %v2225
        %v2227 = vpop.f32.mrb[0].mxu0
        %2228 = vmatprep.mubr.bf16.mxu0 %v564
        %2229 = vmatmul.mubr.bf16.gmra.mrb[0].mxu0 %v563
        %v2230 = vpop.f32.mrb[0].mxu0
        %v2231 = vadd.f32 0.0, %v2230
        %v2232 = vpop.f32.mrb[0].mxu0
        %v2233 = vpop.f32.mrb[0].mxu0
        %v2234 = vpop.f32.mrb[0].mxu0
        %2235 = vdwg.mxu0
        %2236 = vmatprep.subr.bf16.mxu0 0
        %2237 = vmatpush1.bf16.msra.mxu0 %v1328
        %2238 = vmatprep.subr.bf16.mxu0 0
        %2239 = vmatpush1.bf16.msra.mxu0 %v1337
        %2240 = vmatprep.subr.bf16.mxu0 0
        %2241 = vmatpush1.bf16.msra.mxu0 %v1346
        %2242 = vmatprep.subr.bf16.mxu0 0
        %2243 = vmatpush1.bf16.msra.mxu0 %v1355
        %2244 = vmatprep.subr.bf16.mxu0 0
        %2245 = vmatpush1.bf16.msra.mxu0 %v1364
        %2246 = vmatprep.subr.bf16.mxu0 0
        %2247 = vmatpush1.bf16.msra.mxu0 %v1602
        %2248 = vmatprep.subr.bf16.mxu0 0
        %2249 = vmatpush1.bf16.msra.mxu0 0
        %2250 = vmatprep.subr.bf16.mxu0 0
        %2251 = vmatpush1.bf16.msra.mxu0 0
        %2252 = vmatprep.subr.bf16.mxu0 0
        %2253 = vmatpush1.bf16.msra.mxu0 0
        %2254 = vmatprep.subr.bf16.mxu0 0
        %2255 = vmatpush1.bf16.msra.mxu0 0
        %2256 = vmatprep.subr.bf16.mxu0 0
        %2257 = vmatpush1.bf16.msra.mxu0 0
        %2258 = vmatprep.subr.bf16.mxu0 0
        %2259 = vmatpush1.bf16.msra.mxu0 0
        %2260 = vmatprep.subr.bf16.mxu0 0
        %2261 = vmatpush1.bf16.msra.mxu0 0
        %2262 = vmatprep.subr.bf16.mxu0 0
        %2263 = vmatpush1.bf16.msra.mxu0 0
        %2264 = vmatprep.subr.bf16.mxu0 0
        %2265 = vmatpush1.bf16.msra.mxu0 0
        %2266 = vmatprep.subr.bf16.mxu0 0
        %2267 = vmatpush1.bf16.msra.mxu0 0
        %2268 = vmatprep.mubr.bf16.mxu0 0
        %2269 = vmatmul.mubr.bf16.gmra.mrb[0].mxu0 %v1565
        %v2270 = vpop.f32.mrb[0].mxu0
        %v2271 = vadd.f32 %v2207, %v2270
        %v2272 = vpop.f32.mrb[0].mxu0
        %v2273 = vpop.f32.mrb[0].mxu0
        %v2274 = vadd.f32 %v2210, %v2273
        %v2275 = vpop.f32.mrb[0].mxu0
        %2276 = vmatprep.mubr.bf16.mxu0 0
        %2277 = vmatmul.mubr.bf16.gmra.mrb[0].mxu0 %v1568
        %v2278 = vpop.f32.mrb[0].mxu0
        %v2279 = vadd.f32 %v2215, %v2278
        %v2280 = vpop.f32.mrb[0].mxu0
        %v2281 = vpop.f32.mrb[0].mxu0
        %v2282 = vadd.f32 %v2218, %v2281
        %v2283 = vpop.f32.mrb[0].mxu0
        %2284 = vmatprep.mubr.bf16.mxu0 0
        %2285 = vmatmul.mubr.bf16.gmra.mrb[0].mxu0 %v1571
        %v2286 = vpop.f32.mrb[0].mxu0
        %v2287 = vadd.f32 %v2223, %v2286
        %v2288 = vpop.f32.mrb[0].mxu0
        %v2289 = vpop.f32.mrb[0].mxu0
        %v2290 = vadd.f32 %v2226, %v2289
        %v2291 = vpop.f32.mrb[0].mxu0
        %2292 = vmatprep.mubr.bf16.mxu0 0
        %2293 = vmatmul.mubr.bf16.gmra.mrb[0].mxu0 %v1574
        %v2294 = vpop.f32.mrb[0].mxu0
        %v2295 = vadd.f32 %v2231, %v2294
        %v2296 = vpop.f32.mrb[0].mxu0
        %v2297 = vpop.f32.mrb[0].mxu0
        %v2298 = vpop.f32.mrb[0].mxu0
        %2299 = vdwg.mxu0
        %v2300 = vadd.f32 %v1710, %v1714
        %v2301 = vadd.f32 %v2300, %v1720
        %v2302 = vadd.f32 %v2301, %v1724
        %v2303 = vadd.f32 %v2302, %v1730
        %v2304 = vadd.f32 %v2303, %v1734
        %vm2305 = vcmask 1040384
        %v2306 = vsel %vm2305, %v1740, 0.0
        %v2307 = vadd.f32 %v2304, %v2306
        %v2308 = vrot.slane %v2307, 4
        %v2309 = vadd.f32 %v2307, %v2308
        %v2310 = vrot.slane %v2309, 2
        %v2311 = vadd.f32 %v2309, %v2310
        %v2312 = vrot.slane %v2311, 1
        %v2313 = vadd.f32 %v2311, %v2312
        %v2314 = vadd.f32 %v1712, %v1716
        %v2315 = vadd.f32 %v2314, %v1722
        %v2316 = vadd.f32 %v2315, %v1726
        %v2317 = vadd.f32 %v2316, %v1732
        %v2318 = vadd.f32 %v2317, %v1736
        %v2319 = vsel %vm2305, %v1742, 0.0
        %v2320 = vadd.f32 %v2318, %v2319
        %v2321 = vrot.slane %v2320, 4
        %v2322 = vadd.f32 %v2320, %v2321
        %v2323 = vrot.slane %v2322, 2
        %v2324 = vadd.f32 %v2322, %v2323
        %v2325 = vrot.slane %v2324, 1
        %v2326 = vadd.f32 %v2324, %v2325
        %v2327 = vadd.f32 %v1852, %v1856
        %v2328 = vadd.f32 %v2327, %v1862
        %v2329 = vadd.f32 %v2328, %v1866
        %v2330 = vadd.f32 %v2329, %v1872
        %v2331 = vadd.f32 %v2330, %v1876
        %v2332 = vsel %vm2305, %v1882, 0.0
        %v2333 = vadd.f32 %v2331, %v2332
        %v2334 = vrot.slane %v2333, 4
        %v2335 = vadd.f32 %v2333, %v2334
        %v2336 = vrot.slane %v2335, 2
        %v2337 = vadd.f32 %v2335, %v2336
        %v2338 = vrot.slane %v2337, 1
        %v2339 = vadd.f32 %v2337, %v2338
        %v2340 = vadd.f32 %v1854, %v1858
        %v2341 = vadd.f32 %v2340, %v1864
        %v2342 = vadd.f32 %v2341, %v1868
        %v2343 = vadd.f32 %v2342, %v1874
        %v2344 = vadd.f32 %v2343, %v1878
        %v2345 = vsel %vm2305, %v1884, 0.0
        %v2346 = vadd.f32 %v2344, %v2345
        %v2347 = vrot.slane %v2346, 4
        %v2348 = vadd.f32 %v2346, %v2347
        %v2349 = vrot.slane %v2348, 2
        %v2350 = vadd.f32 %v2348, %v2349
        %v2351 = vrot.slane %v2350, 1
        %v2352 = vadd.f32 %v2350, %v2351
        %v2353 = vadd.f32 %v1994, %v1998
        %v2354 = vadd.f32 %v2353, %v2004
        %v2355 = vadd.f32 %v2354, %v2008
        %v2356 = vadd.f32 %v2355, %v2014
        %v2357 = vadd.f32 %v2356, %v2018
        %v2358 = vsel %vm2305, %v2024, 0.0
        %v2359 = vadd.f32 %v2357, %v2358
        %v2360 = vrot.slane %v2359, 4
        %v2361 = vadd.f32 %v2359, %v2360
        %v2362 = vrot.slane %v2361, 2
        %v2363 = vadd.f32 %v2361, %v2362
        %v2364 = vrot.slane %v2363, 1
        %v2365 = vadd.f32 %v2363, %v2364
        %v2366 = vadd.f32 %v1996, %v2000
        %v2367 = vadd.f32 %v2366, %v2006
        %v2368 = vadd.f32 %v2367, %v2010
        %v2369 = vadd.f32 %v2368, %v2016
        %v2370 = vadd.f32 %v2369, %v2020
        %v2371 = vsel %vm2305, %v2026, 0.0
        %v2372 = vadd.f32 %v2370, %v2371
        %v2373 = vrot.slane %v2372, 4
        %v2374 = vadd.f32 %v2372, %v2373
        %v2375 = vrot.slane %v2374, 2
        %v2376 = vadd.f32 %v2374, %v2375
        %v2377 = vrot.slane %v2376, 1
        %v2378 = vadd.f32 %v2376, %v2377
        %v2379 = vadd.f32 %v2136, %v2140
        %v2380 = vadd.f32 %v2379, %v2146
        %v2381 = vadd.f32 %v2380, %v2150
        %v2382 = vadd.f32 %v2381, %v2156
        %v2383 = vadd.f32 %v2382, %v2160
        %v2384 = vsel %vm2305, %v2166, 0.0
        %v2385 = vadd.f32 %v2383, %v2384
        %v2386 = vrot.slane %v2385, 4
        %v2387 = vadd.f32 %v2385, %v2386
        %v2388 = vrot.slane %v2387, 2
        %v2389 = vadd.f32 %v2387, %v2388
        %v2390 = vrot.slane %v2389, 1
        %v2391 = vadd.f32 %v2389, %v2390
        %v2392 = vadd.f32 %v2138, %v2142
        %v2393 = vadd.f32 %v2392, %v2148
        %v2394 = vadd.f32 %v2393, %v2152
        %v2395 = vadd.f32 %v2394, %v2158
        %v2396 = vadd.f32 %v2395, %v2162
        %v2397 = vsel %vm2305, %v2168, 0.0
        %v2398 = vadd.f32 %v2396, %v2397
        %v2399 = vrot.slane %v2398, 4
        %v2400 = vadd.f32 %v2398, %v2399
        %v2401 = vrot.slane %v2400, 2
        %v2402 = vadd.f32 %v2400, %v2401
        %v2403 = vrot.slane %v2402, 1
        %v2404 = vadd.f32 %v2402, %v2403
        %v2405 = vadd.f32 %v2271, %v2274
        %v2406 = vadd.f32 %v2405, %v2279
        %v2407 = vadd.f32 %v2406, %v2282
        %v2408 = vadd.f32 %v2407, %v2287
        %v2409 = vadd.f32 %v2408, %v2290
        %v2410 = vsel %vm2305, %v2295, 0.0
        %v2411 = vadd.f32 %v2409, %v2410
        %v2412 = vrot.slane %v2411, 4
        %v2413 = vadd.f32 %v2411, %v2412
        %v2414 = vrot.slane %v2413, 2
        %v2415 = vadd.f32 %v2413, %v2414
        %v2416 = vrot.slane %v2415, 1
        %v2417 = vadd.f32 %v2415, %v2416
        %v2418 = vmul.f32 %v2313, 0.020408163
        %v2419 = vmul.f32 %v2326, 0.020408163
        %v2420 = vmul.f32 %v2339, 0.020408163
        %v2421 = vmul.f32 %v2352, 0.020408163
        %v2422 = vmul.f32 %v2365, 0.020408163
        %v2423 = vmul.f32 %v2378, 0.020408163
        %v2424 = vmul.f32 %v2391, 0.020408163
        %v2425 = vmul.f32 %v2404, 0.020408163
        %v2426 = vmul.f32 %v2417, 0.020408163
        %v2427 = vsub.f32 %v1710, %v2418
        %v2428 = vsub.f32 %v1712, %v2419
        %v2429 = vsub.f32 %v1852, %v2420
        %v2430 = vsub.f32 %v1854, %v2421
        %v2431 = vsub.f32 %v1994, %v2422
        %v2432 = vsub.f32 %v1996, %v2423
        %v2433 = vsub.f32 %v2136, %v2424
        %v2434 = vsub.f32 %v2138, %v2425
        %v2435 = vsub.f32 %v2271, %v2426
        %v2436 = vsub.f32 %v1714, %v2418
        %v2437 = vsub.f32 %v1716, %v2419
        %v2438 = vsub.f32 %v1856, %v2420
        %v2439 = vsub.f32 %v1858, %v2421
        %v2440 = vsub.f32 %v1998, %v2422
        %v2441 = vsub.f32 %v2000, %v2423
        %v2442 = vsub.f32 %v2140, %v2424
        %v2443 = vsub.f32 %v2142, %v2425
        %v2444 = vsub.f32 %v2274, %v2426
        %v2445 = vsub.f32 %v1720, %v2418
        %v2446 = vsub.f32 %v1722, %v2419
        %v2447 = vsub.f32 %v1862, %v2420
        %v2448 = vsub.f32 %v1864, %v2421
        %v2449 = vsub.f32 %v2004, %v2422
        %v2450 = vsub.f32 %v2006, %v2423
        %v2451 = vsub.f32 %v2146, %v2424
        %v2452 = vsub.f32 %v2148, %v2425
        %v2453 = vsub.f32 %v2279, %v2426
        %v2454 = vsub.f32 %v1724, %v2418
        %v2455 = vsub.f32 %v1726, %v2419
        %v2456 = vsub.f32 %v1866, %v2420
        %v2457 = vsub.f32 %v1868, %v2421
        %v2458 = vsub.f32 %v2008, %v2422
        %v2459 = vsub.f32 %v2010, %v2423
        %v2460 = vsub.f32 %v2150, %v2424
        %v2461 = vsub.f32 %v2152, %v2425
        %v2462 = vsub.f32 %v2282, %v2426
        %v2463 = vsub.f32 %v1730, %v2418
        %v2464 = vsub.f32 %v1732, %v2419
        %v2465 = vsub.f32 %v1872, %v2420
        %v2466 = vsub.f32 %v1874, %v2421
        %v2467 = vsub.f32 %v2014, %v2422
        %v2468 = vsub.f32 %v2016, %v2423
        %v2469 = vsub.f32 %v2156, %v2424
        %v2470 = vsub.f32 %v2158, %v2425
        %v2471 = vsub.f32 %v2287, %v2426
        %v2472 = vsub.f32 %v1734, %v2418
        %v2473 = vsub.f32 %v1736, %v2419
        %v2474 = vsub.f32 %v1876, %v2420
        %v2475 = vsub.f32 %v1878, %v2421
        %v2476 = vsub.f32 %v2018, %v2422
        %v2477 = vsub.f32 %v2020, %v2423
        %v2478 = vsub.f32 %v2160, %v2424
        %v2479 = vsub.f32 %v2162, %v2425
        %v2480 = vsub.f32 %v2290, %v2426
        %v2481 = vsub.f32 %v1740, %v2418
        %v2482 = vsub.f32 %v1742, %v2419
        %v2483 = vsub.f32 %v1882, %v2420
        %v2484 = vsub.f32 %v1884, %v2421
        %v2485 = vsub.f32 %v2024, %v2422
        %v2486 = vsub.f32 %v2026, %v2423
        %v2487 = vsub.f32 %v2166, %v2424
        %v2488 = vsub.f32 %v2168, %v2425
        %v2489 = vsub.f32 %v2295, %v2426
        %v2490 = vmul.f32 %v2427, %v2427
        %v2491 = vmul.f32 %v2428, %v2428
        %v2492 = vmul.f32 %v2429, %v2429
        %v2493 = vmul.f32 %v2430, %v2430
        %v2494 = vmul.f32 %v2431, %v2431
        %v2495 = vmul.f32 %v2432, %v2432
        %v2496 = vmul.f32 %v2433, %v2433
        %v2497 = vmul.f32 %v2434, %v2434
        %v2498 = vmul.f32 %v2435, %v2435
        %v2499 = vmul.f32 %v2436, %v2436
        %v2500 = vmul.f32 %v2437, %v2437
        %v2501 = vmul.f32 %v2438, %v2438
        %v2502 = vmul.f32 %v2439, %v2439
        %v2503 = vmul.f32 %v2440, %v2440
        %v2504 = vmul.f32 %v2441, %v2441
        %v2505 = vmul.f32 %v2442, %v2442
        %v2506 = vmul.f32 %v2443, %v2443
        %v2507 = vmul.f32 %v2444, %v2444
        %v2508 = vmul.f32 %v2445, %v2445
        %v2509 = vmul.f32 %v2446, %v2446
        %v2510 = vmul.f32 %v2447, %v2447
        %v2511 = vmul.f32 %v2448, %v2448
        %v2512 = vmul.f32 %v2449, %v2449
        %v2513 = vmul.f32 %v2450, %v2450
        %v2514 = vmul.f32 %v2451, %v2451
        %v2515 = vmul.f32 %v2452, %v2452
        %v2516 = vmul.f32 %v2453, %v2453
        %v2517 = vmul.f32 %v2454, %v2454
        %v2518 = vmul.f32 %v2455, %v2455
        %v2519 = vmul.f32 %v2456, %v2456
        %v2520 = vmul.f32 %v2457, %v2457
        %v2521 = vmul.f32 %v2458, %v2458
        %v2522 = vmul.f32 %v2459, %v2459
        %v2523 = vmul.f32 %v2460, %v2460
        %v2524 = vmul.f32 %v2461, %v2461
        %v2525 = vmul.f32 %v2462, %v2462
        %v2526 = vmul.f32 %v2463, %v2463
        %v2527 = vmul.f32 %v2464, %v2464
        %v2528 = vmul.f32 %v2465, %v2465
        %v2529 = vmul.f32 %v2466, %v2466
        %v2530 = vmul.f32 %v2467, %v2467
        %v2531 = vmul.f32 %v2468, %v2468
        %v2532 = vmul.f32 %v2469, %v2469
        %v2533 = vmul.f32 %v2470, %v2470
        %v2534 = vmul.f32 %v2471, %v2471
        %v2535 = vmul.f32 %v2472, %v2472
        %v2536 = vmul.f32 %v2473, %v2473
        %v2537 = vmul.f32 %v2474, %v2474
        %v2538 = vmul.f32 %v2475, %v2475
        %v2539 = vmul.f32 %v2476, %v2476
        %v2540 = vmul.f32 %v2477, %v2477
        %v2541 = vmul.f32 %v2478, %v2478
        %v2542 = vmul.f32 %v2479, %v2479
        %v2543 = vmul.f32 %v2480, %v2480
        %v2544 = vmul.f32 %v2481, %v2481
        %v2545 = vmul.f32 %v2482, %v2482
        %v2546 = vmul.f32 %v2483, %v2483
        %v2547 = vmul.f32 %v2484, %v2484
        %v2548 = vmul.f32 %v2485, %v2485
        %v2549 = vmul.f32 %v2486, %v2486
        %v2550 = vmul.f32 %v2487, %v2487
        %v2551 = vmul.f32 %v2488, %v2488
        %v2552 = vmul.f32 %v2489, %v2489
        %v2553 = vadd.f32 %v2490, %v2499
        %v2554 = vadd.f32 %v2553, %v2508
        %v2555 = vadd.f32 %v2554, %v2517
        %v2556 = vadd.f32 %v2555, %v2526
        %v2557 = vadd.f32 %v2556, %v2535
        %v2558 = vsel %vm2305, %v2544, 0.0
        %v2559 = vadd.f32 %v2557, %v2558
        %v2560 = vrot.slane %v2559, 4
        %v2561 = vadd.f32 %v2559, %v2560
        %v2562 = vrot.slane %v2561, 2
        %v2563 = vadd.f32 %v2561, %v2562
        %v2564 = vrot.slane %v2563, 1
        %v2565 = vadd.f32 %v2563, %v2564
        %v2566 = vadd.f32 %v2491, %v2500
        %v2567 = vadd.f32 %v2566, %v2509
        %v2568 = vadd.f32 %v2567, %v2518
        %v2569 = vadd.f32 %v2568, %v2527
        %v2570 = vadd.f32 %v2569, %v2536
        %v2571 = vsel %vm2305, %v2545, 0.0
        %v2572 = vadd.f32 %v2570, %v2571
        %v2573 = vrot.slane %v2572, 4
        %v2574 = vadd.f32 %v2572, %v2573
        %v2575 = vrot.slane %v2574, 2
        %v2576 = vadd.f32 %v2574, %v2575
        %v2577 = vrot.slane %v2576, 1
        %v2578 = vadd.f32 %v2576, %v2577
        %v2579 = vadd.f32 %v2492, %v2501
        %v2580 = vadd.f32 %v2579, %v2510
        %v2581 = vadd.f32 %v2580, %v2519
        %v2582 = vadd.f32 %v2581, %v2528
        %v2583 = vadd.f32 %v2582, %v2537
        %v2584 = vsel %vm2305, %v2546, 0.0
        %v2585 = vadd.f32 %v2583, %v2584
        %v2586 = vrot.slane %v2585, 4
        %v2587 = vadd.f32 %v2585, %v2586
        %v2588 = vrot.slane %v2587, 2
        %v2589 = vadd.f32 %v2587, %v2588
        %v2590 = vrot.slane %v2589, 1
        %v2591 = vadd.f32 %v2589, %v2590
        %v2592 = vadd.f32 %v2493, %v2502
        %v2593 = vadd.f32 %v2592, %v2511
        %v2594 = vadd.f32 %v2593, %v2520
        %v2595 = vadd.f32 %v2594, %v2529
        %v2596 = vadd.f32 %v2595, %v2538
        %v2597 = vsel %vm2305, %v2547, 0.0
        %v2598 = vadd.f32 %v2596, %v2597
        %v2599 = vrot.slane %v2598, 4
        %v2600 = vadd.f32 %v2598, %v2599
        %v2601 = vrot.slane %v2600, 2
        %v2602 = vadd.f32 %v2600, %v2601
        %v2603 = vrot.slane %v2602, 1
        %v2604 = vadd.f32 %v2602, %v2603
        %v2605 = vadd.f32 %v2494, %v2503
        %v2606 = vadd.f32 %v2605, %v2512
        %v2607 = vadd.f32 %v2606, %v2521
        %v2608 = vadd.f32 %v2607, %v2530
        %v2609 = vadd.f32 %v2608, %v2539
        %v2610 = vsel %vm2305, %v2548, 0.0
        %v2611 = vadd.f32 %v2609, %v2610
        %v2612 = vrot.slane %v2611, 4
        %v2613 = vadd.f32 %v2611, %v2612
        %v2614 = vrot.slane %v2613, 2
        %v2615 = vadd.f32 %v2613, %v2614
        %v2616 = vrot.slane %v2615, 1
        %v2617 = vadd.f32 %v2615, %v2616
        %v2618 = vadd.f32 %v2495, %v2504
        %v2619 = vadd.f32 %v2618, %v2513
        %v2620 = vadd.f32 %v2619, %v2522
        %v2621 = vadd.f32 %v2620, %v2531
        %v2622 = vadd.f32 %v2621, %v2540
        %v2623 = vsel %vm2305, %v2549, 0.0
        %v2624 = vadd.f32 %v2622, %v2623
        %v2625 = vrot.slane %v2624, 4
        %v2626 = vadd.f32 %v2624, %v2625
        %v2627 = vrot.slane %v2626, 2
        %v2628 = vadd.f32 %v2626, %v2627
        %v2629 = vrot.slane %v2628, 1
        %v2630 = vadd.f32 %v2628, %v2629
        %v2631 = vadd.f32 %v2496, %v2505
        %v2632 = vadd.f32 %v2631, %v2514
        %v2633 = vadd.f32 %v2632, %v2523
        %v2634 = vadd.f32 %v2633, %v2532
        %v2635 = vadd.f32 %v2634, %v2541
        %v2636 = vsel %vm2305, %v2550, 0.0
        %v2637 = vadd.f32 %v2635, %v2636
        %v2638 = vrot.slane %v2637, 4
        %v2639 = vadd.f32 %v2637, %v2638
        %v2640 = vrot.slane %v2639, 2
        %v2641 = vadd.f32 %v2639, %v2640
        %v2642 = vrot.slane %v2641, 1
        %v2643 = vadd.f32 %v2641, %v2642
        %v2644 = vadd.f32 %v2497, %v2506
        %v2645 = vadd.f32 %v2644, %v2515
        %v2646 = vadd.f32 %v2645, %v2524
        %v2647 = vadd.f32 %v2646, %v2533
        %v2648 = vadd.f32 %v2647, %v2542
        %v2649 = vsel %vm2305, %v2551, 0.0
        %v2650 = vadd.f32 %v2648, %v2649
        %v2651 = vrot.slane %v2650, 4
        %v2652 = vadd.f32 %v2650, %v2651
        %v2653 = vrot.slane %v2652, 2
        %v2654 = vadd.f32 %v2652, %v2653
        %v2655 = vrot.slane %v2654, 1
        %v2656 = vadd.f32 %v2654, %v2655
        %v2657 = vadd.f32 %v2498, %v2507
        %v2658 = vadd.f32 %v2657, %v2516
        %v2659 = vadd.f32 %v2658, %v2525
        %v2660 = vadd.f32 %v2659, %v2534
        %v2661 = vadd.f32 %v2660, %v2543
        %v2662 = vsel %vm2305, %v2552, 0.0
        %v2663 = vadd.f32 %v2661, %v2662
        %v2664 = vrot.slane %v2663, 4
        %v2665 = vadd.f32 %v2663, %v2664
        %v2666 = vrot.slane %v2665, 2
        %v2667 = vadd.f32 %v2665, %v2666
        %v2668 = vrot.slane %v2667, 1
        %v2669 = vadd.f32 %v2667, %v2668
        %v2670 = vmul.f32 %v2565, 0.020408163
        %v2671 = vmul.f32 %v2578, 0.020408163
        %v2672 = vmul.f32 %v2591, 0.020408163
        %v2673 = vmul.f32 %v2604, 0.020408163
        %v2674 = vmul.f32 %v2617, 0.020408163
        %v2675 = vmul.f32 %v2630, 0.020408163
        %v2676 = vmul.f32 %v2643, 0.020408163
        %v2677 = vmul.f32 %v2656, 0.020408163
        %v2678 = vmul.f32 %v2669, 0.020408163
        %v2679 = vadd.f32 %v2670, 1e-05
        %v2680 = vadd.f32 %v2671, 1e-05
        %v2681 = vadd.f32 %v2672, 1e-05
        %v2682 = vadd.f32 %v2673, 1e-05
        %v2683 = vadd.f32 %v2674, 1e-05
        %v2684 = vadd.f32 %v2675, 1e-05
        %v2685 = vadd.f32 %v2676, 1e-05
        %v2686 = vadd.f32 %v2677, 1e-05
        %v2687 = vadd.f32 %v2678, 1e-05
        %v2688 = vrsqrt.pop %v2679
        %v2689 = vrsqrt.pop %v2680
        %v2690 = vrsqrt.pop %v2681
        %v2691 = vrsqrt.pop %v2682
        %v2692 = vrsqrt.pop %v2683
        %v2693 = vrsqrt.pop %v2684
        %v2694 = vrsqrt.pop %v2685
        %v2695 = vrsqrt.pop %v2686
        %v2696 = vrsqrt.pop %v2687
        %v2697 = vld [vmem:[%s242] sm:$0xff]
        %v2698 = vld [vmem:[%s242 + $0x8] sm:$0x1]
        %v2701 = vlaneseq
        %v2702 = vshrl.u32 %v2701, 7
        %v2703 = vsub.s32 0, %v2702
        %v2704 = vrot.slane %v2697, %v2703
        %v2705 = vlaneseq
        %v2706 = vshrl.u32 %v2705, 7
        %v2707 = vsub.s32 1, %v2706
        %v2708 = vrot.slane %v2697, %v2707
        %v2709 = vlaneseq
        %v2710 = vshrl.u32 %v2709, 7
        %v2711 = vsub.s32 2, %v2710
        %v2712 = vrot.slane %v2697, %v2711
        %v2713 = vlaneseq
        %v2714 = vshrl.u32 %v2713, 7
        %v2715 = vsub.s32 3, %v2714
        %v2716 = vrot.slane %v2697, %v2715
        %v2717 = vlaneseq
        %v2718 = vshrl.u32 %v2717, 7
        %v2719 = vsub.s32 4, %v2718
        %v2720 = vrot.slane %v2697, %v2719
        %v2721 = vlaneseq
        %v2722 = vshrl.u32 %v2721, 7
        %v2723 = vsub.s32 5, %v2722
        %v2724 = vrot.slane %v2697, %v2723
        %v2725 = vlaneseq
        %v2726 = vshrl.u32 %v2725, 7
        %v2727 = vsub.s32 6, %v2726
        %v2728 = vrot.slane %v2697, %v2727
        %v2729 = vlaneseq
        %v2730 = vshrl.u32 %v2729, 7
        %v2731 = vsub.s32 7, %v2730
        %v2732 = vrot.slane %v2697, %v2731
        %v2733 = vlaneseq
        %v2734 = vshrl.u32 %v2733, 7
        %v2735 = vsub.s32 0, %v2734
        %v2736 = vrot.slane %v2698, %v2735
        %v2746 = vmul.f32 %v2688, %v2704
        %v2747 = vmul.f32 %v2689, %v2708
        %v2748 = vmul.f32 %v2690, %v2712
        %v2749 = vmul.f32 %v2691, %v2716
        %v2750 = vmul.f32 %v2692, %v2720
        %v2751 = vmul.f32 %v2693, %v2724
        %v2752 = vmul.f32 %v2694, %v2728
        %v2753 = vmul.f32 %v2695, %v2732
        %v2754 = vmul.f32 %v2696, %v2736
        %v2755 = vlaneseq
        %v2756 = vshrl.u32 %v2755, 7
        %v2757 = vsub.s32 0, %v2756
        %v2758 = vrot.slane %v2746, %v2757
        %v2759 = vlaneseq
        %v2760 = vshrl.u32 %v2759, 7
        %v2761 = vsub.s32 0, %v2760
        %v2762 = vrot.slane %v2747, %v2761
        %v2763 = vlaneseq
        %v2764 = vshrl.u32 %v2763, 7
        %v2765 = vsub.s32 0, %v2764
        %v2766 = vrot.slane %v2748, %v2765
        %v2767 = vlaneseq
        %v2768 = vshrl.u32 %v2767, 7
        %v2769 = vsub.s32 0, %v2768
        %v2770 = vrot.slane %v2749, %v2769
        %v2771 = vlaneseq
        %v2772 = vshrl.u32 %v2771, 7
        %v2773 = vsub.s32 0, %v2772
        %v2774 = vrot.slane %v2750, %v2773
        %v2775 = vlaneseq
        %v2776 = vshrl.u32 %v2775, 7
        %v2777 = vsub.s32 0, %v2776
        %v2778 = vrot.slane %v2751, %v2777
        %v2779 = vlaneseq
        %v2780 = vshrl.u32 %v2779, 7
        %v2781 = vsub.s32 0, %v2780
        %v2782 = vrot.slane %v2752, %v2781
        %v2783 = vlaneseq
        %v2784 = vshrl.u32 %v2783, 7
        %v2785 = vsub.s32 0, %v2784
        %v2786 = vrot.slane %v2753, %v2785
        %v2787 = vlaneseq
        %v2788 = vshrl.u32 %v2787, 7
        %v2789 = vsub.s32 0, %v2788
        %v2790 = vrot.slane %v2754, %v2789
        %v2791 = vmul.f32 %v2427, %v2758
        %v2792 = vmul.f32 %v2428, %v2762
        %v2793 = vmul.f32 %v2429, %v2766
        %v2794 = vmul.f32 %v2430, %v2770
        %v2795 = vmul.f32 %v2431, %v2774
        %v2796 = vmul.f32 %v2432, %v2778
        %v2797 = vmul.f32 %v2433, %v2782
        %v2798 = vmul.f32 %v2434, %v2786
        %v2799 = vmul.f32 %v2435, %v2790
        %v2800 = vmul.f32 %v2436, %v2758
        %v2801 = vmul.f32 %v2437, %v2762
        %v2802 = vmul.f32 %v2438, %v2766
        %v2803 = vmul.f32 %v2439, %v2770
        %v2804 = vmul.f32 %v2440, %v2774
        %v2805 = vmul.f32 %v2441, %v2778
        %v2806 = vmul.f32 %v2442, %v2782
        %v2807 = vmul.f32 %v2443, %v2786
        %v2808 = vmul.f32 %v2444, %v2790
        %v2809 = vmul.f32 %v2445, %v2758
        %v2810 = vmul.f32 %v2446, %v2762
        %v2811 = vmul.f32 %v2447, %v2766
        %v2812 = vmul.f32 %v2448, %v2770
        %v2813 = vmul.f32 %v2449, %v2774
        %v2814 = vmul.f32 %v2450, %v2778
        %v2815 = vmul.f32 %v2451, %v2782
        %v2816 = vmul.f32 %v2452, %v2786
        %v2817 = vmul.f32 %v2453, %v2790
        %v2818 = vmul.f32 %v2454, %v2758
        %v2819 = vmul.f32 %v2455, %v2762
        %v2820 = vmul.f32 %v2456, %v2766
        %v2821 = vmul.f32 %v2457, %v2770
        %v2822 = vmul.f32 %v2458, %v2774
        %v2823 = vmul.f32 %v2459, %v2778
        %v2824 = vmul.f32 %v2460, %v2782
        %v2825 = vmul.f32 %v2461, %v2786
        %v2826 = vmul.f32 %v2462, %v2790
        %v2827 = vmul.f32 %v2463, %v2758
        %v2828 = vmul.f32 %v2464, %v2762
        %v2829 = vmul.f32 %v2465, %v2766
        %v2830 = vmul.f32 %v2466, %v2770
        %v2831 = vmul.f32 %v2467, %v2774
        %v2832 = vmul.f32 %v2468, %v2778
        %v2833 = vmul.f32 %v2469, %v2782
        %v2834 = vmul.f32 %v2470, %v2786
        %v2835 = vmul.f32 %v2471, %v2790
        %v2836 = vmul.f32 %v2472, %v2758
        %v2837 = vmul.f32 %v2473, %v2762
        %v2838 = vmul.f32 %v2474, %v2766
        %v2839 = vmul.f32 %v2475, %v2770
        %v2840 = vmul.f32 %v2476, %v2774
        %v2841 = vmul.f32 %v2477, %v2778
        %v2842 = vmul.f32 %v2478, %v2782
        %v2843 = vmul.f32 %v2479, %v2786
        %v2844 = vmul.f32 %v2480, %v2790
        %v2845 = vmul.f32 %v2481, %v2758
        %v2846 = vmul.f32 %v2482, %v2762
        %v2847 = vmul.f32 %v2483, %v2766
        %v2848 = vmul.f32 %v2484, %v2770
        %v2849 = vmul.f32 %v2485, %v2774
        %v2850 = vmul.f32 %v2486, %v2778
        %v2851 = vmul.f32 %v2487, %v2782
        %v2852 = vmul.f32 %v2488, %v2786
        %v2853 = vmul.f32 %v2489, %v2790
        %v2854 = vld [vmem:[%s251] sm:$0xff]
        %v2855 = vld [vmem:[%s251 + $0x8] sm:$0x1]
        %v2858 = vlaneseq
        %v2859 = vshrl.u32 %v2858, 7
        %v2860 = vsub.s32 0, %v2859
        %v2861 = vrot.slane %v2854, %v2860
        %v2862 = vlaneseq
        %v2863 = vshrl.u32 %v2862, 7
        %v2864 = vsub.s32 1, %v2863
        %v2865 = vrot.slane %v2854, %v2864
        %v2866 = vlaneseq
        %v2867 = vshrl.u32 %v2866, 7
        %v2868 = vsub.s32 2, %v2867
        %v2869 = vrot.slane %v2854, %v2868
        %v2870 = vlaneseq
        %v2871 = vshrl.u32 %v2870, 7
        %v2872 = vsub.s32 3, %v2871
        %v2873 = vrot.slane %v2854, %v2872
        %v2874 = vlaneseq
        %v2875 = vshrl.u32 %v2874, 7
        %v2876 = vsub.s32 4, %v2875
        %v2877 = vrot.slane %v2854, %v2876
        %v2878 = vlaneseq
        %v2879 = vshrl.u32 %v2878, 7
        %v2880 = vsub.s32 5, %v2879
        %v2881 = vrot.slane %v2854, %v2880
        %v2882 = vlaneseq
        %v2883 = vshrl.u32 %v2882, 7
        %v2884 = vsub.s32 6, %v2883
        %v2885 = vrot.slane %v2854, %v2884
        %v2886 = vlaneseq
        %v2887 = vshrl.u32 %v2886, 7
        %v2888 = vsub.s32 7, %v2887
        %v2889 = vrot.slane %v2854, %v2888
        %v2890 = vlaneseq
        %v2891 = vshrl.u32 %v2890, 7
        %v2892 = vsub.s32 0, %v2891
        %v2893 = vrot.slane %v2855, %v2892
        %v2903 = vadd.f32 %v2791, %v2861
        %v2904 = vadd.f32 %v2792, %v2865
        %v2905 = vadd.f32 %v2793, %v2869
        %v2906 = vadd.f32 %v2794, %v2873
        %v2907 = vadd.f32 %v2795, %v2877
        %v2908 = vadd.f32 %v2796, %v2881
        %v2909 = vadd.f32 %v2797, %v2885
        %v2910 = vadd.f32 %v2798, %v2889
        %v2911 = vadd.f32 %v2799, %v2893
        %v2912 = vadd.f32 %v2800, %v2861
        %v2913 = vadd.f32 %v2801, %v2865
        %v2914 = vadd.f32 %v2802, %v2869
        %v2915 = vadd.f32 %v2803, %v2873
        %v2916 = vadd.f32 %v2804, %v2877
        %v2917 = vadd.f32 %v2805, %v2881
        %v2918 = vadd.f32 %v2806, %v2885
        %v2919 = vadd.f32 %v2807, %v2889
        %v2920 = vadd.f32 %v2808, %v2893
        %v2921 = vadd.f32 %v2809, %v2861
        %v2922 = vadd.f32 %v2810, %v2865
        %v2923 = vadd.f32 %v2811, %v2869
        %v2924 = vadd.f32 %v2812, %v2873
        %v2925 = vadd.f32 %v2813, %v2877
        %v2926 = vadd.f32 %v2814, %v2881
        %v2927 = vadd.f32 %v2815, %v2885
        %v2928 = vadd.f32 %v2816, %v2889
        %v2929 = vadd.f32 %v2817, %v2893
        %v2930 = vadd.f32 %v2818, %v2861
        %v2931 = vadd.f32 %v2819, %v2865
        %v2932 = vadd.f32 %v2820, %v2869
        %v2933 = vadd.f32 %v2821, %v2873
        %v2934 = vadd.f32 %v2822, %v2877
        %v2935 = vadd.f32 %v2823, %v2881
        %v2936 = vadd.f32 %v2824, %v2885
        %v2937 = vadd.f32 %v2825, %v2889
        %v2938 = vadd.f32 %v2826, %v2893
        %v2939 = vadd.f32 %v2827, %v2861
        %v2940 = vadd.f32 %v2828, %v2865
        %v2941 = vadd.f32 %v2829, %v2869
        %v2942 = vadd.f32 %v2830, %v2873
        %v2943 = vadd.f32 %v2831, %v2877
        %v2944 = vadd.f32 %v2832, %v2881
        %v2945 = vadd.f32 %v2833, %v2885
        %v2946 = vadd.f32 %v2834, %v2889
        %v2947 = vadd.f32 %v2835, %v2893
        %v2948 = vadd.f32 %v2836, %v2861
        %v2949 = vadd.f32 %v2837, %v2865
        %v2950 = vadd.f32 %v2838, %v2869
        %v2951 = vadd.f32 %v2839, %v2873
        %v2952 = vadd.f32 %v2840, %v2877
        %v2953 = vadd.f32 %v2841, %v2881
        %v2954 = vadd.f32 %v2842, %v2885
        %v2955 = vadd.f32 %v2843, %v2889
        %v2956 = vadd.f32 %v2844, %v2893
        %v2957 = vadd.f32 %v2845, %v2861
        %v2958 = vadd.f32 %v2846, %v2865
        %v2959 = vadd.f32 %v2847, %v2869
        %v2960 = vadd.f32 %v2848, %v2873
        %v2961 = vadd.f32 %v2849, %v2877
        %v2962 = vadd.f32 %v2850, %v2881
        %v2963 = vadd.f32 %v2851, %v2885
        %v2964 = vadd.f32 %v2852, %v2889
        %v2965 = vadd.f32 %v2853, %v2893
        %2966 = vst [vmem:[%s284] sm:$0xff] %v2903
        %2967 = vst [vmem:[%s284 + $0x8] sm:$0xff] %v2904
        %2968 = vst [vmem:[%s284 + $0x10] sm:$0xff] %v2905
        %2969 = vst [vmem:[%s284 + $0x18] sm:$0xff] %v2906
        %2970 = vst [vmem:[%s284 + $0x20] sm:$0xff] %v2907
        %2971 = vst [vmem:[%s284 + $0x28] sm:$0xff] %v2908
        %2972 = vst [vmem:[%s284 + $0x30] sm:$0xff] %v2909
        %2973 = vst [vmem:[%s284 + $0x38] sm:$0xff] %v2910
        %2974 = vst [vmem:[%s284 + $0x40] sm:$0xff] %v2911
        %2975 = vst [vmem:[%s284 + $0x48] sm:$0xff] %v2912
        %2976 = vst [vmem:[%s284 + $0x50] sm:$0xff] %v2913
        %2977 = vst [vmem:[%s284 + $0x58] sm:$0xff] %v2914
        %2978 = vst [vmem:[%s284 + $0x60] sm:$0xff] %v2915
        %2979 = vst [vmem:[%s284 + $0x68] sm:$0xff] %v2916
        %2980 = vst [vmem:[%s284 + $0x70] sm:$0xff] %v2917
        %2981 = vst [vmem:[%s284 + $0x78] sm:$0xff] %v2918
        %2982 = vst [vmem:[%s284 + $0x80] sm:$0xff] %v2919
        %2983 = vst [vmem:[%s284 + $0x88] sm:$0xff] %v2920
        %2984 = vst [vmem:[%s284 + $0x90] sm:$0xff] %v2921
        %2985 = vst [vmem:[%s284 + $0x98] sm:$0xff] %v2922
        %2986 = vst [vmem:[%s284 + $0xa0] sm:$0xff] %v2923
        %2987 = vst [vmem:[%s284 + $0xa8] sm:$0xff] %v2924
        %2988 = vst [vmem:[%s284 + $0xb0] sm:$0xff] %v2925
        %2989 = vst [vmem:[%s284 + $0xb8] sm:$0xff] %v2926
        %2990 = vst [vmem:[%s284 + $0xc0] sm:$0xff] %v2927
        %2991 = vst [vmem:[%s284 + $0xc8] sm:$0xff] %v2928
        %2992 = vst [vmem:[%s284 + $0xd0] sm:$0xff] %v2929
        %2993 = vst [vmem:[%s284 + $0xd8] sm:$0xff] %v2930
        %2994 = vst [vmem:[%s284 + $0xe0] sm:$0xff] %v2931
        %2995 = vst [vmem:[%s284 + $0xe8] sm:$0xff] %v2932
        %2996 = vst [vmem:[%s284 + $0xf0] sm:$0xff] %v2933
        %2997 = vst [vmem:[%s284 + $0xf8] sm:$0xff] %v2934
        %2998 = vst [vmem:[%s284 + $0x100] sm:$0xff] %v2935
        %2999 = vst [vmem:[%s284 + $0x108] sm:$0xff] %v2936
        %3000 = vst [vmem:[%s284 + $0x110] sm:$0xff] %v2937
        %3001 = vst [vmem:[%s284 + $0x118] sm:$0xff] %v2938
        %3002 = vst [vmem:[%s284 + $0x120] sm:$0xff] %v2939
        %3003 = vst [vmem:[%s284 + $0x128] sm:$0xff] %v2940
        %3004 = vst [vmem:[%s284 + $0x130] sm:$0xff] %v2941
        %3005 = vst [vmem:[%s284 + $0x138] sm:$0xff] %v2942
        %3006 = vst [vmem:[%s284 + $0x140] sm:$0xff] %v2943
        %3007 = vst [vmem:[%s284 + $0x148] sm:$0xff] %v2944
        %3008 = vst [vmem:[%s284 + $0x150] sm:$0xff] %v2945
        %3009 = vst [vmem:[%s284 + $0x158] sm:$0xff] %v2946
        %3010 = vst [vmem:[%s284 + $0x160] sm:$0xff] %v2947
        %3011 = vst [vmem:[%s284 + $0x168] sm:$0xff] %v2948
        %3012 = vst [vmem:[%s284 + $0x170] sm:$0xff] %v2949
        %3013 = vst [vmem:[%s284 + $0x178] sm:$0xff] %v2950
        %3014 = vst [vmem:[%s284 + $0x180] sm:$0xff] %v2951
        %3015 = vst [vmem:[%s284 + $0x188] sm:$0xff] %v2952
        %3016 = vst [vmem:[%s284 + $0x190] sm:$0xff] %v2953
        %3017 = vst [vmem:[%s284 + $0x198] sm:$0xff] %v2954
        %3018 = vst [vmem:[%s284 + $0x1a0] sm:$0xff] %v2955
        %3019 = vst [vmem:[%s284 + $0x1a8] sm:$0xff] %v2956
        %3020 = vst [vmem:[%s284 + $0x1b0] sm:$0x1] %v2957
        %3021 = vst [vmem:[%s284 + $0x1b8] sm:$0x1] %v2958
        %3022 = vst [vmem:[%s284 + $0x1c0] sm:$0x1] %v2959
        %3023 = vst [vmem:[%s284 + $0x1c8] sm:$0x1] %v2960
        %3024 = vst [vmem:[%s284 + $0x1d0] sm:$0x1] %v2961
        %3025 = vst [vmem:[%s284 + $0x1d8] sm:$0x1] %v2962
        %3026 = vst [vmem:[%s284 + $0x1e0] sm:$0x1] %v2963
        %3027 = vst [vmem:[%s284 + $0x1e8] sm:$0x1] %v2964
        %3028 = vst [vmem:[%s284 + $0x1f0] sm:$0x1] %v2965
        %s3029 = sand.u32 %s128, 1
        %s3030 = sand.u32 %s128, 1
        %s3031 = smul.addr %s3030, 504
        %s3032 = scalar_lea.vmem [#allocation7], %s3031
        // Predicated region
        $region49: #{_lambda_.1} parent=35 // pred_check
          %p3033 = pneg %p138
        $region50: #{_lambda_.1} parent=35 // pred_check_branch
          %3035 = sbr.rel (%p3033) target = $region52
        $region51: #{_lambda_.1} parent=35 // pred_region
          %s3036 = smul.u32 9, %s21
          %s3037 = smul.addr %s3036, 8
          %s3038 = scalar_lea.vmem %s4, %s3037
          // Predicated region
          $region53: #{_lambda_.1} parent=51 // pred_check
            _
          $region54: #{_lambda_.1} parent=51 // pred_check_branch
            %3040 = sbr.rel (0) target = $region56
          $region55: #{_lambda_.1} parent=51 // pred_region
            // Predicated region
            $region57: #{_lambda_.1} parent=55 // pred_check
              _
            $region58: #{_lambda_.1} parent=55 // pred_check_branch
              %3042 = sbr.rel (0) target = $region60
            $region59: #{_lambda_.1} parent=55 // pred_region
              loop: start=0, step=1, limit=1
              $region61: #{_lambda_.1} parent=59 // loop_pre_header
                _
              $region62: #{_lambda_.1} parent=59 // loop_header
                %s3044 = sphi 0, %s3048
                %p3045 = scmp.ge.s32.totalorder %s3044, 1
                %s3049 = sphi %s3032, %s3032
                %s3050 = sphi %s3038, %s3038
              $region63: #{_lambda_.1} parent=59 // loop_header_branch
                %3047 = sbr.rel (%p3045) target = $region67
              $region64: #{_lambda_.1} parent=59 // loop_body
                %v3051 = vld [vmem:[%s3049] sm:$0xff]
                %3052 = vst [vmem:[%s3050] sm:$0xff] %v3051
                %v3053 = vld [vmem:[%s3049 + $0x8] sm:$0xff]
                %3054 = vst [vmem:[%s3050 + $0x8] sm:$0xff] %v3053
                %v3055 = vld [vmem:[%s3049 + $0x10] sm:$0xff]
                %3056 = vst [vmem:[%s3050 + $0x10] sm:$0xff] %v3055
                %v3057 = vld [vmem:[%s3049 + $0x18] sm:$0xff]
                %3058 = vst [vmem:[%s3050 + $0x18] sm:$0xff] %v3057
                %v3059 = vld [vmem:[%s3049 + $0x20] sm:$0xff]
                %3060 = vst [vmem:[%s3050 + $0x20] sm:$0xff] %v3059
                %v3061 = vld [vmem:[%s3049 + $0x28] sm:$0xff]
                %3062 = vst [vmem:[%s3050 + $0x28] sm:$0xff] %v3061
                %v3063 = vld [vmem:[%s3049 + $0x30] sm:$0xff]
                %3064 = vst [vmem:[%s3050 + $0x30] sm:$0xff] %v3063
                %v3065 = vld [vmem:[%s3049 + $0x38] sm:$0xff]
                %3066 = vst [vmem:[%s3050 + $0x38] sm:$0xff] %v3065
                %v3067 = vld [vmem:[%s3049 + $0x40] sm:$0xff]
                %3068 = vst [vmem:[%s3050 + $0x40] sm:$0xff] %v3067
                %v3069 = vld [vmem:[%s3049 + $0x48] sm:$0xff]
                %3070 = vst [vmem:[%s3050 + $0x90] sm:$0xff] %v3069
                %v3071 = vld [vmem:[%s3049 + $0x50] sm:$0xff]
                %3072 = vst [vmem:[%s3050 + $0x98] sm:$0xff] %v3071
                %v3073 = vld [vmem:[%s3049 + $0x58] sm:$0xff]
                %3074 = vst [vmem:[%s3050 + $0xa0] sm:$0xff] %v3073
                %v3075 = vld [vmem:[%s3049 + $0x60] sm:$0xff]
                %3076 = vst [vmem:[%s3050 + $0xa8] sm:$0xff] %v3075
                %v3077 = vld [vmem:[%s3049 + $0x68] sm:$0xff]
                %3078 = vst [vmem:[%s3050 + $0xb0] sm:$0xff] %v3077
                %v3079 = vld [vmem:[%s3049 + $0x70] sm:$0xff]
                %3080 = vst [vmem:[%s3050 + $0xb8] sm:$0xff] %v3079
                %v3081 = vld [vmem:[%s3049 + $0x78] sm:$0xff]
                %3082 = vst [vmem:[%s3050 + $0xc0] sm:$0xff] %v3081
                %v3083 = vld [vmem:[%s3049 + $0x80] sm:$0xff]
                %3084 = vst [vmem:[%s3050 + $0xc8] sm:$0xff] %v3083
                %v3085 = vld [vmem:[%s3049 + $0x88] sm:$0xff]
                %3086 = vst [vmem:[%s3050 + $0xd0] sm:$0xff] %v3085
                %v3087 = vld [vmem:[%s3049 + $0x90] sm:$0xff]
                %3088 = vst [vmem:[%s3050 + $0x120] sm:$0xff] %v3087
                %v3089 = vld [vmem:[%s3049 + $0x98] sm:$0xff]
                %3090 = vst [vmem:[%s3050 + $0x128] sm:$0xff] %v3089
                %v3091 = vld [vmem:[%s3049 + $0xa0] sm:$0xff]
                %3092 = vst [vmem:[%s3050 + $0x130] sm:$0xff] %v3091
                %v3093 = vld [vmem:[%s3049 + $0xa8] sm:$0xff]
                %3094 = vst [vmem:[%s3050 + $0x138] sm:$0xff] %v3093
                %v3095 = vld [vmem:[%s3049 + $0xb0] sm:$0xff]
                %3096 = vst [vmem:[%s3050 + $0x140] sm:$0xff] %v3095
                %v3097 = vld [vmem:[%s3049 + $0xb8] sm:$0xff]
                %3098 = vst [vmem:[%s3050 + $0x148] sm:$0xff] %v3097
                %v3099 = vld [vmem:[%s3049 + $0xc0] sm:$0xff]
                %3100 = vst [vmem:[%s3050 + $0x150] sm:$0xff] %v3099
                %v3101 = vld [vmem:[%s3049 + $0xc8] sm:$0xff]
                %3102 = vst [vmem:[%s3050 + $0x158] sm:$0xff] %v3101
                %v3103 = vld [vmem:[%s3049 + $0xd0] sm:$0xff]
                %3104 = vst [vmem:[%s3050 + $0x160] sm:$0xff] %v3103
                %v3105 = vld [vmem:[%s3049 + $0xd8] sm:$0xff]
                %3106 = vst [vmem:[%s3050 + $0x1b0] sm:$0xff] %v3105
                %v3107 = vld [vmem:[%s3049 + $0xe0] sm:$0xff]
                %3108 = vst [vmem:[%s3050 + $0x1b8] sm:$0xff] %v3107
                %v3109 = vld [vmem:[%s3049 + $0xe8] sm:$0xff]
                %3110 = vst [vmem:[%s3050 + $0x1c0] sm:$0xff] %v3109
                %v3111 = vld [vmem:[%s3049 + $0xf0] sm:$0xff]
                %3112 = vst [vmem:[%s3050 + $0x1c8] sm:$0xff] %v3111
                %v3113 = vld [vmem:[%s3049 + $0xf8] sm:$0xff]
                %3114 = vst [vmem:[%s3050 + $0x1d0] sm:$0xff] %v3113
                %v3115 = vld [vmem:[%s3049 + $0x100] sm:$0xff]
                %3116 = vst [vmem:[%s3050 + $0x1d8] sm:$0xff] %v3115
                %v3117 = vld [vmem:[%s3049 + $0x108] sm:$0xff]
                %3118 = vst [vmem:[%s3050 + $0x1e0] sm:$0xff] %v3117
                %v3119 = vld [vmem:[%s3049 + $0x110] sm:$0xff]
                %3120 = vst [vmem:[%s3050 + $0x1e8] sm:$0xff] %v3119
                %v3121 = vld [vmem:[%s3049 + $0x118] sm:$0xff]
                %3122 = vst [vmem:[%s3050 + $0x1f0] sm:$0xff] %v3121
                %v3123 = vld [vmem:[%s3049 + $0x120] sm:$0xff]
                %3124 = vst [vmem:[%s3050 + $0x240] sm:$0xff] %v3123
                %v3125 = vld [vmem:[%s3049 + $0x128] sm:$0xff]
                %3126 = vst [vmem:[%s3050 + $0x248] sm:$0xff] %v3125
                %v3127 = vld [vmem:[%s3049 + $0x130] sm:$0xff]
                %3128 = vst [vmem:[%s3050 + $0x250] sm:$0xff] %v3127
                %v3129 = vld [vmem:[%s3049 + $0x138] sm:$0xff]
                %3130 = vst [vmem:[%s3050 + $0x258] sm:$0xff] %v3129
                %v3131 = vld [vmem:[%s3049 + $0x140] sm:$0xff]
                %3132 = vst [vmem:[%s3050 + $0x260] sm:$0xff] %v3131
                %v3133 = vld [vmem:[%s3049 + $0x148] sm:$0xff]
                %3134 = vst [vmem:[%s3050 + $0x268] sm:$0xff] %v3133
                %v3135 = vld [vmem:[%s3049 + $0x150] sm:$0xff]
                %3136 = vst [vmem:[%s3050 + $0x270] sm:$0xff] %v3135
                %v3137 = vld [vmem:[%s3049 + $0x158] sm:$0xff]
                %3138 = vst [vmem:[%s3050 + $0x278] sm:$0xff] %v3137
                %v3139 = vld [vmem:[%s3049 + $0x160] sm:$0xff]
                %3140 = vst [vmem:[%s3050 + $0x280] sm:$0xff] %v3139
                %v3141 = vld [vmem:[%s3049 + $0x168] sm:$0xff]
                %3142 = vst [vmem:[%s3050 + $0x2d0] sm:$0xff] %v3141
                %v3143 = vld [vmem:[%s3049 + $0x170] sm:$0xff]
                %3144 = vst [vmem:[%s3050 + $0x2d8] sm:$0xff] %v3143
                %v3145 = vld [vmem:[%s3049 + $0x178] sm:$0xff]
                %3146 = vst [vmem:[%s3050 + $0x2e0] sm:$0xff] %v3145
                %v3147 = vld [vmem:[%s3049 + $0x180] sm:$0xff]
                %3148 = vst [vmem:[%s3050 + $0x2e8] sm:$0xff] %v3147
                %v3149 = vld [vmem:[%s3049 + $0x188] sm:$0xff]
                %3150 = vst [vmem:[%s3050 + $0x2f0] sm:$0xff] %v3149
                %v3151 = vld [vmem:[%s3049 + $0x190] sm:$0xff]
                %3152 = vst [vmem:[%s3050 + $0x2f8] sm:$0xff] %v3151
                %v3153 = vld [vmem:[%s3049 + $0x198] sm:$0xff]
                %3154 = vst [vmem:[%s3050 + $0x300] sm:$0xff] %v3153
                %v3155 = vld [vmem:[%s3049 + $0x1a0] sm:$0xff]
                %3156 = vst [vmem:[%s3050 + $0x308] sm:$0xff] %v3155
                %v3157 = vld [vmem:[%s3049 + $0x1a8] sm:$0xff]
                %3158 = vst [vmem:[%s3050 + $0x310] sm:$0xff] %v3157
                %v3159 = vld [vmem:[%s3049 + $0x1b0] sm:$0xff]
                %3160 = vst [vmem:[%s3050 + $0x360] sm:$0xff] %v3159
                %v3161 = vld [vmem:[%s3049 + $0x1b8] sm:$0xff]
                %3162 = vst [vmem:[%s3050 + $0x368] sm:$0xff] %v3161
                %v3163 = vld [vmem:[%s3049 + $0x1c0] sm:$0xff]
                %3164 = vst [vmem:[%s3050 + $0x370] sm:$0xff] %v3163
                %v3165 = vld [vmem:[%s3049 + $0x1c8] sm:$0xff]
                %3166 = vst [vmem:[%s3050 + $0x378] sm:$0xff] %v3165
                %v3167 = vld [vmem:[%s3049 + $0x1d0] sm:$0xff]
                %3168 = vst [vmem:[%s3050 + $0x380] sm:$0xff] %v3167
                %v3169 = vld [vmem:[%s3049 + $0x1d8] sm:$0xff]
                %3170 = vst [vmem:[%s3050 + $0x388] sm:$0xff] %v3169
                %v3171 = vld [vmem:[%s3049 + $0x1e0] sm:$0xff]
                %3172 = vst [vmem:[%s3050 + $0x390] sm:$0xff] %v3171
                %v3173 = vld [vmem:[%s3049 + $0x1e8] sm:$0xff]
                %3174 = vst [vmem:[%s3050 + $0x398] sm:$0xff] %v3173
                %v3175 = vld [vmem:[%s3049 + $0x1f0] sm:$0xff]
                %3176 = vst [vmem:[%s3050 + $0x3a0] sm:$0xff] %v3175
              $region65: #{_lambda_.1} parent=59 // loop_footer
                %s3048 = sadd.s32 1, %s3044
              $region66: #{_lambda_.1} parent=59 // loop_footer_branch
                %3043 = sbr.rel target = $region62
              $region67: #{_lambda_.1} parent=59 // loop_exit
                _
            $region60: #{_lambda_.1} parent=55 // pred_fallthru
              _
            // Predicated region
            $region68: #{_lambda_.1} parent=55 // pred_check
              _
            $region69: #{_lambda_.1} parent=55 // pred_check_branch
              %3178 = sbr.rel target = $region71
            $region70: #{_lambda_.1} parent=55 // pred_region
              _
            $region71: #{_lambda_.1} parent=55 // pred_fallthru
              _
          $region56: #{_lambda_.1} parent=51 // pred_fallthru
            _
          %3179 = vnop
        $region52: #{_lambda_.1} parent=35 // pred_fallthru
          _
      $region36: #{_lambda_.1} parent=5 // pred_fallthru
        _
      %p3180 = scmp.le.s32.totalorder 2, %s16
      // Predicated region
      $region72: #{_lambda_.1} parent=5 // pred_check
        %p3181 = pneg %p3180
      $region73: #{_lambda_.1} parent=5 // pred_check_branch
        %3183 = sbr.rel (%p3181) target = $region75
      $region74: #{_lambda_.1} parent=5 // pred_region
        %s3184 = ssub.s32 %s16, 2
        // Predicated region
        $region76: #{_lambda_.1} parent=74 // pred_check
          %p3185 = pneg %p144
        $region77: #{_lambda_.1} parent=74 // pred_check_branch
          %3187 = sbr.rel (%p3185) target = $region79
        $region78: #{_lambda_.1} parent=74 // pred_region
          %s3188 = sand.u32 %s129, 1
          %s3189 = sand.u32 %s129, 1
          %s3190 = smul.addr %s3189, 504
          %s3191 = scalar_lea.vmem [#allocation7], %s3190
        $region79: #{_lambda_.1} parent=74 // pred_fallthru
          _
      $region75: #{_lambda_.1} parent=5 // pred_fallthru
        _
    $region6: #{_lambda_.1} parent=1 // loop_footer
      %s20 = sadd.s32 1, %s16
    $region7: #{_lambda_.1} parent=1 // loop_footer_branch
      %15 = sbr.rel target = $region3
    $region8: #{_lambda_.1} parent=1 // loop_exit
      _
    %3192 = vsyncpa [#allocation3], 1
    %s3193 = scalar_lea.sflag [#allocation3], 1
    %3194 = vsyncpa %s3193, 1
    %3195 = vsyncpa [#allocation5], 1
    %s3196 = scalar_lea.sflag [#allocation5], 1
    %3197 = vsyncpa %s3196, 1

</llo_original>
